<compile_context>
chip_gen: v6e
topology: v6e:2x2x1
jax: 0.10.0
libtpu: 0.0.40
codegen_flags: <defaults>
</compile_context>

<pallas_src>
import functools

import jax
import jax.numpy as jnp
from jax import lax
from jax.experimental import pallas as pl
from jax.experimental.pallas import tpu as pltpu


def _round_up(x, m):
    return ((x + m - 1) // m) * m


# --------------------------------- fused forward kernel ---------------------------------

def fused_model_kernel(ids_ref, emb_ref,
                       w1_ref, b1_ref, w2_ref, b2_ref,
                       wi_e_ref, wi_c_ref, wh_ref, bg_ref, wl_ref, bl_ref,
                       h0_ref, c0_ref, out_ref,
                       *, B, S, K, dil1, dil2, Hp, Lp):
    BS = B * S
    Vp = emb_ref.shape[0]

    # ---- embedding lookup as a one-hot matmul (gather-free, one bf16 MXU pass) ----
    # NOTE: ids is a tiny (BS, 1) i32 VMEM tile; if this ever becomes a row-gather,
    # move it to SMEM scalar prefetch instead.
    ids = ids_ref[...]                                             # (BS, 1) int32
    vocab_iota = lax.broadcasted_iota(jnp.int32, (BS, Vp), 1)
    onehot = (vocab_iota == ids).astype(jnp.bfloat16)              # exact in bf16
    emb = jnp.dot(onehot, emb_ref[...],
                  preferred_element_type=jnp.float32)              # (BS, E) f32

    # position of each row inside its batch element (the convs' time axis)
    pos = lax.broadcasted_iota(jnp.int32, (BS, 1), 0) % S          # (BS, 1)

    # ---- dilated Conv1d('same') + ReLU via tap-wise accumulation (no im2col / concat) ----
    def conv_relu(x, w_ref_l, b_ref_l, dil):
        # x: (BS, Cin) f32;  w_ref_l: (K, Cin, Cout) bf16;  b_ref_l: (1, Cout) f32
        pad = dil * (K - 1) // 2
        acc = None
        for k in range(K):                                         # K = 3, static unroll
            d = k * dil - pad                                      # time offset of this tap
            if d == 0:
                xs = x
            else:
                # shift rows by d along time (sublane roll); rows whose source falls
                # outside the current batch element are masked to zero.
                xs = pltpu.roll(x, (-d) % BS, axis=0)
                valid = jnp.logical_and(pos + d >= 0, pos + d < S)
                xs = jnp.where(valid, xs, 0.0)
            tap = jnp.dot(xs.astype(jnp.bfloat16), w_ref_l[k],
                          preferred_element_type=jnp.float32)      # (BS, Cout)
            acc = tap if acc is None else acc + tap
        return jnp.maximum(acc + b_ref_l[...], 0.0)

    h1 = conv_relu(emb, w1_ref, b1_ref, dil1)                      # (BS, C1) f32
    h2 = conv_relu(h1, w2_ref, b2_ref, dil2)                       # (BS, C2) f32

    # ---- single-layer LSTM over "time"=B, batch=S ----
    # char_output = cat(emb, conv) is never built: wi is split row-wise into wi_emb /
    # wi_conv and the two matmuls are summed. The whole x@W_i projection (+ gate bias)
    # is hoisted out of the serial recurrence.
    gates_x = (jnp.dot(emb.astype(jnp.bfloat16), wi_e_ref[...],
                       preferred_element_type=jnp.float32)
               + jnp.dot(h2.astype(jnp.bfloat16), wi_c_ref[...],
                         preferred_element_type=jnp.float32)
               + bg_ref[...])                                      # (BS, 4*Hp), order [i,f,o,g]

    wh = wh_ref[...]                                               # (Hp, 4*Hp) bf16
    h = h0_ref[...]                                                # (S, Hp) f32
    c = c0_ref[...]
    hs = []
    # Padded hidden lanes (H..Hp) stay exactly zero: h0/c0, the padded columns of
    # wi/wh/bg and the padded rows of wl are all zero, so f=i=o=0.5, g=0 there and
    # the padded c/h remain 0 through the recurrence.
    for t in range(B):                                             # T = B (=2), static unroll
        gates = gates_x[t * S:(t + 1) * S, :] + jnp.dot(
            h.astype(jnp.bfloat16), wh, preferred_element_type=jnp.float32)
        sig = jax.nn.sigmoid(gates[:, :3 * Hp])                    # one contiguous EUP slab
        i_g = sig[:, 0:Hp]
        f_g = sig[:, Hp:2 * Hp]
        o_g = sig[:, 2 * Hp:3 * Hp]
        g_g = jnp.tanh(gates[:, 3 * Hp:])
        c = f_g * c + i_g * g_g
        h = o_g * jnp.tanh(c)
        hs.append(h)

    # ---- hidden2label + log_softmax once for all steps; single lane-dense store ----
    h_all = jnp.concatenate(hs, axis=0)                            # (BS, Hp): stack of full vregs
    y = jnp.dot(h_all.astype(jnp.bfloat16), wl_ref[...],
                preferred_element_type=jnp.float32) + bl_ref[...]  # (BS, Lp)
    # bl carries -1e30 on the padded label lanes, so no explicit mask is needed.
    y = y - jnp.max(y, axis=-1, keepdims=True)
    y = y - jnp.log(jnp.sum(jnp.exp(y), axis=-1, keepdims=True))
    out_ref[...] = y.astype(out_ref.dtype)                         # (16, 128) unmasked store


# -------------------------------------- model glue ---------------------------------------

def model_forward(char_input, params, hidden_key):
    B, S = char_input.shape
    meta = params["meta"]
    H, Hp, Lp, num_tag = meta["H"], meta["Hp"], meta["Lp"], meta["num_tag"]

    ids = char_input.reshape(B * S, 1).astype(jnp.int32)

    # nn.LSTM(batch_first=False) treats (B, S, D) as (time=B, batch=S); init_hidden draws
    # random (1, S, H) states each forward (reproduced here, zero-padded to Hp lanes so
    # the padded hidden lanes stay exactly zero in the recurrence).
    kh, kc = jax.random.split(hidden_key)
    h0 = jnp.pad(jax.random.normal(kh, (S, H), jnp.float32), ((0, 0), (0, Hp - H)))
    c0 = jnp.pad(jax.random.normal(kc, (S, H), jnp.float32), ((0, 0), (0, Hp - H)))

    kern = functools.partial(
        fused_model_kernel,
        B=B, S=S, K=meta["K"], dil1=meta["dil1"], dil2=meta["dil2"], Hp=Hp, Lp=Lp)

    vmem = pl.BlockSpec(memory_space=pltpu.MemorySpace.VMEM)
    out = pl.pallas_call(
        kern,
        out_shape=jax.ShapeDtypeStruct((B * S, Lp), jnp.float32),
        in_specs=[vmem] * 14,
        out_specs=vmem,
        # TODO(synk): for large S, add an S-parallel grid axis (dimension_semantics=
        # ("parallel",)) so the second TensorCore on v7x is used; pointless at S=8.
    )(ids, params["emb"],
      params["w1"], params["b1"], params["w2"], params["b2"],
      params["wi_emb"], params["wi_conv"], params["wh"], params["bg"],
      params["wl"], params["bl"], h0, c0)

    return out.reshape(B, S, Lp)[:, :, :num_tag]                   # (B, S, num_tag) log-probs


def make_params(key, vocab, emb_size, channels, kernel_size, num_tag):
    """Random params (PyTorch init is random anyway), pre-packed / padded for the kernel:
       conv weights kept per-tap (K, Cin, Cout) bf16; LSTM gates packed [i,f,o,g] into
       (D,4*Hp)/(Hp,4*Hp) bf16 with hidden padded 112->128 and W_i split row-wise into an
       embedding part and a conv part; hidden2label padded to (Hp, 128) lane-dense with
       the label mask baked into the bias (-1e30 on padded lanes)."""
    assert len(channels) == 3, "kernel is specialized to exactly two conv layers"
    ks = jax.random.split(key, 16)
    K = kernel_size
    E = emb_size
    Vp = _round_up(vocab, 8)

    emb = jax.random.normal(ks[0], (vocab, E), jnp.float32) * 0.1
    emb = jnp.pad(emb, ((0, Vp - vocab), (0, 0))).astype(jnp.bfloat16)  # padded rows never hit

    conv_ws, conv_bs, dils = [], [], []
    ki = 1
    for layer in range(len(channels) - 1):
        cin, cout = channels[layer], channels[layer + 1]
        dil = 2 ** layer                                          # dilated=True
        w = jax.random.normal(ks[ki], (K, cin, cout), jnp.float32) * 0.1
        b = jax.random.normal(ks[ki + 1], (1, cout), jnp.float32) * 0.1
        conv_ws.append(w.astype(jnp.bfloat16))
        conv_bs.append(b)
        dils.append(dil)
        ki += 2

    D = E + channels[-1]
    H = 64 + D                                                    # 64 + emb + conv channels
    Hp = _round_up(H, 128)
    Lp = _round_up(max(num_tag, 128), 128)

    # gate order [i, f, o, g]: sigmoid gates contiguous, tanh gate last (PyTorch order is
    # [i, f, g, o] — permute here if loading a checkpoint). Zero-padded so padded hidden
    # units stay exactly zero through the recurrence.
    wi = jax.random.normal(ks[ki], (4, D, H), jnp.float32) * 0.1
    wh = jax.random.normal(ks[ki + 1], (4, H, H), jnp.float32) * 0.1
    bg = jax.random.normal(ks[ki + 2], (4, H), jnp.float32) * 0.1     # b_ih + b_hh combined
    wl = jax.random.normal(ks[ki + 3], (H, num_tag), jnp.float32) * 0.1
    bl = jax.random.normal(ks[ki + 4], (1, num_tag), jnp.float32) * 0.1

    wi_p = jnp.pad(wi, ((0, 0), (0, 0), (0, Hp - H)))             # (4, D, Hp)
    wh_p = jnp.pad(wh, ((0, 0), (0, Hp - H), (0, Hp - H)))        # (4, Hp, Hp)
    bg_p = jnp.pad(bg, ((0, 0), (0, Hp - H)))                     # (4, Hp)

    wi_packed = jnp.transpose(wi_p, (1, 0, 2)).reshape(D, 4 * Hp).astype(jnp.bfloat16)

    return {
        "emb": emb,
        "w1": conv_ws[0], "b1": conv_bs[0],
        "w2": conv_ws[1], "b2": conv_bs[1],
        "wi_emb": wi_packed[:E],                                  # (E, 4*Hp)  bf16
        "wi_conv": wi_packed[E:],                                 # (C2, 4*Hp) bf16
        "wh": jnp.transpose(wh_p, (1, 0, 2)).reshape(Hp, 4 * Hp).astype(jnp.bfloat16),
        "bg": bg_p.reshape(1, 4 * Hp),
        "wl": jnp.pad(wl, ((0, Hp - H), (0, Lp - num_tag))).astype(jnp.bfloat16),
        "bl": jnp.pad(bl, ((0, 0), (0, Lp - num_tag)), constant_values=-1e30),
        "meta": {"K": K, "D": D, "H": H, "Hp": Hp, "Lp": Lp,
                 "num_tag": num_tag, "Vp": Vp, "dil1": dils[0], "dil2": dils[1]},
    }


if __name__ == "__main__":
    # Small shapes consistent with the module.
    batch, seq_len = 2, 8
    vocab, emb_size = 30, 16
    char_channels = [emb_size, 32, 32]     # channels[0]=input size, channels[-1]=conv out size
    kernel_size = 3
    num_tag = 10

    root = jax.random.PRNGKey(0)
    k_param, k_input, k_hidden = jax.random.split(root, 3)

    params = make_params(k_param, vocab, emb_size, char_channels, kernel_size, num_tag)
    char_input = jax.random.randint(k_input, (batch, seq_len), 0, vocab, dtype=jnp.int32)

    fwd = jax.jit(lambda ci, hk: model_forward(ci, params, hk))
    out = fwd(char_input, k_hidden)
    out = jax.block_until_ready(out)

    assert out.shape == (batch, seq_len, num_tag), out.shape
    # log_softmax rows should sum to 1 in prob space.
    assert bool(jnp.allclose(jnp.sum(jnp.exp(out), axis=-1), 1.0, atol=1e-3))
    print("KERNEL_OK")
</pallas_src>

<mosaic_0001>
module attributes {stable_mosaic.version = 11 : i64} {
  func.func @fused_model_kernel(%arg0: memref<16x1xi32, #tpu.memory_space<vmem>>, %arg1: memref<32x16xbf16, #tpu.memory_space<vmem>>, %arg2: memref<3x16x32xbf16, #tpu.memory_space<vmem>>, %arg3: memref<1x32xf32, #tpu.memory_space<vmem>>, %arg4: memref<3x32x32xbf16, #tpu.memory_space<vmem>>, %arg5: memref<1x32xf32, #tpu.memory_space<vmem>>, %arg6: memref<16x512xbf16, #tpu.memory_space<vmem>>, %arg7: memref<32x512xbf16, #tpu.memory_space<vmem>>, %arg8: memref<128x512xbf16, #tpu.memory_space<vmem>>, %arg9: memref<1x512xf32, #tpu.memory_space<vmem>>, %arg10: memref<128x128xbf16, #tpu.memory_space<vmem>>, %arg11: memref<1x128xf32, #tpu.memory_space<vmem>>, %arg12: memref<8x128xf32, #tpu.memory_space<vmem>>, %arg13: memref<8x128xf32, #tpu.memory_space<vmem>>, %arg14: memref<16x128xf32, #tpu.memory_space<vmem>>) attributes {dimension_semantics = [], scalar_prefetch = 0 : i64, scratch_operands = 0 : i64, tpu.core_type = #tpu.core_type<tc>} {
    %c0 = arith.constant 0 : index
    %c0_0 = arith.constant 0 : index
    %0 = vector.load %arg0[%c0, %c0_0] : memref<16x1xi32, #tpu.memory_space<vmem>>, vector<16x1xi32>
    %1 = tpu.iota {dimensions = array<i32: 1>} : vector<16x32xi32>
    %2 = vector.broadcast %0 : vector<16x1xi32> to vector<16x32xi32>
    %3 = arith.cmpi eq, %1, %2 : vector<16x32xi32>
    %4 = arith.extui %3 : vector<16x32xi1> to vector<16x32xi32>
    %5 = arith.sitofp %4 : vector<16x32xi32> to vector<16x32xf32>
    %6 = arith.truncf %5 : vector<16x32xf32> to vector<16x32xbf16>
    %c0_1 = arith.constant 0 : index
    %c0_2 = arith.constant 0 : index
    %7 = vector.load %arg1[%c0_1, %c0_2] : memref<32x16xbf16, #tpu.memory_space<vmem>>, vector<32x16xbf16>
    %cst = arith.constant dense<0.000000e+00> : vector<16x16xf32>
    %8 = tpu.matmul %6, %7, %cst {dimension_numbers = #tpu.dot_dimension_numbers<[1], [0], [0], [1], [0, 0, 1, 1], [], []>} : vector<16x32xbf16>, vector<32x16xbf16>, vector<16x16xf32> -> vector<16x16xf32>
    %9 = tpu.iota {dimensions = array<i32: 0>} : vector<16x1xi32>
    %c8_i32 = arith.constant 8 : i32
    %c0_i32 = arith.constant 0 : i32
    %10 = arith.cmpi eq, %c8_i32, %c0_i32 : i32
    %c1_i32 = arith.constant 1 : i32
    %11 = arith.select %10, %c1_i32, %c8_i32 : i32
    %12 = vector.broadcast %11 : i32 to vector<16x1xi32>
    %13 = arith.remsi %9, %12 : vector<16x1xi32>
    %c0_i32_3 = arith.constant 0 : i32
    %14 = vector.broadcast %c0_i32_3 : i32 to vector<16x1xi32>
    %15 = arith.cmpi ne, %13, %14 : vector<16x1xi32>
    %c0_i32_4 = arith.constant 0 : i32
    %16 = vector.broadcast %c0_i32_4 : i32 to vector<16x1xi32>
    %17 = arith.cmpi slt, %13, %16 : vector<16x1xi32>
    %c0_i32_5 = arith.constant 0 : i32
    %18 = arith.cmpi slt, %11, %c0_i32_5 : i32
    %19 = vector.broadcast %18 : i1 to vector<16x1xi1>
    %20 = vector.broadcast %19 : vector<16x1xi1> to vector<16x1xi1>
    %21 = arith.xori %17, %20 : vector<16x1xi1>
    %22 = arith.andi %21, %15 : vector<16x1xi1>
    %23 = vector.broadcast %11 : i32 to vector<16x1xi32>
    %24 = arith.addi %13, %23 : vector<16x1xi32>
    %25 = arith.select %22, %24, %13 : vector<16x1xi1>, vector<16x1xi32>
    %c1_i32_6 = arith.constant 1 : i32
    %26 = tpu.dynamic_rotate %8 by %c1_i32_6 dim 0 : vector<16x16xf32>, i32 -> vector<16x16xf32>
    %c-1_i32 = arith.constant -1 : i32
    %27 = vector.broadcast %c-1_i32 : i32 to vector<16x1xi32>
    %28 = arith.addi %25, %27 : vector<16x1xi32>
    %c0_i32_7 = arith.constant 0 : i32
    %29 = vector.broadcast %c0_i32_7 : i32 to vector<16x1xi32>
    %30 = arith.cmpi sge, %28, %29 : vector<16x1xi32>
    %c-1_i32_8 = arith.constant -1 : i32
    %31 = vector.broadcast %c-1_i32_8 : i32 to vector<16x1xi32>
    %32 = arith.addi %25, %31 : vector<16x1xi32>
    %c8_i32_9 = arith.constant 8 : i32
    %33 = vector.broadcast %c8_i32_9 : i32 to vector<16x1xi32>
    %34 = arith.cmpi slt, %32, %33 : vector<16x1xi32>
    %35 = arith.andi %30, %34 : vector<16x1xi1>
    %cst_10 = arith.constant 0.000000e+00 : f32
    %36 = vector.shape_cast %35 : vector<16x1xi1> to vector<16x1xi1>
    %37 = vector.broadcast %36 : vector<16x1xi1> to vector<16x16xi1>
    %38 = vector.broadcast %cst_10 : f32 to vector<16x16xf32>
    %39 = arith.select %37, %26, %38 : vector<16x16xi1>, vector<16x16xf32>
    %40 = arith.truncf %39 : vector<16x16xf32> to vector<16x16xbf16>
    %c0_11 = arith.constant 0 : index
    %c0_12 = arith.constant 0 : index
    %c0_13 = arith.constant 0 : index
    %41 = vector.load %arg2[%c0_11, %c0_12, %c0_13] : memref<3x16x32xbf16, #tpu.memory_space<vmem>>, vector<1x16x32xbf16>
    %42 = vector.shape_cast %41 : vector<1x16x32xbf16> to vector<16x32xbf16>
    %cst_14 = arith.constant dense<0.000000e+00> : vector<16x32xf32>
    %43 = tpu.matmul %40, %42, %cst_14 {dimension_numbers = #tpu.dot_dimension_numbers<[1], [0], [0], [1], [0, 0, 1, 1], [], []>} : vector<16x16xbf16>, vector<16x32xbf16>, vector<16x32xf32> -> vector<16x32xf32>
    %44 = arith.truncf %8 : vector<16x16xf32> to vector<16x16xbf16>
    %c1 = arith.constant 1 : index
    %c0_15 = arith.constant 0 : index
    %c0_16 = arith.constant 0 : index
    %45 = vector.load %arg2[%c1, %c0_15, %c0_16] : memref<3x16x32xbf16, #tpu.memory_space<vmem>>, vector<1x16x32xbf16>
    %46 = vector.shape_cast %45 : vector<1x16x32xbf16> to vector<16x32xbf16>
    %cst_17 = arith.constant dense<0.000000e+00> : vector<16x32xf32>
    %47 = tpu.matmul %44, %46, %cst_17 {dimension_numbers = #tpu.dot_dimension_numbers<[1], [0], [0], [1], [0, 0, 1, 1], [], []>} : vector<16x16xbf16>, vector<16x32xbf16>, vector<16x32xf32> -> vector<16x32xf32>
    %48 = arith.addf %43, %47 : vector<16x32xf32>
    %c15_i32 = arith.constant 15 : i32
    %49 = tpu.dynamic_rotate %8 by %c15_i32 dim 0 : vector<16x16xf32>, i32 -> vector<16x16xf32>
    %c1_i32_18 = arith.constant 1 : i32
    %50 = vector.broadcast %c1_i32_18 : i32 to vector<16x1xi32>
    %51 = arith.addi %25, %50 : vector<16x1xi32>
    %c0_i32_19 = arith.constant 0 : i32
    %52 = vector.broadcast %c0_i32_19 : i32 to vector<16x1xi32>
    %53 = arith.cmpi sge, %51, %52 : vector<16x1xi32>
    %c1_i32_20 = arith.constant 1 : i32
    %54 = vector.broadcast %c1_i32_20 : i32 to vector<16x1xi32>
    %55 = arith.addi %25, %54 : vector<16x1xi32>
    %c8_i32_21 = arith.constant 8 : i32
    %56 = vector.broadcast %c8_i32_21 : i32 to vector<16x1xi32>
    %57 = arith.cmpi slt, %55, %56 : vector<16x1xi32>
    %58 = arith.andi %53, %57 : vector<16x1xi1>
    %cst_22 = arith.constant 0.000000e+00 : f32
    %59 = vector.shape_cast %58 : vector<16x1xi1> to vector<16x1xi1>
    %60 = vector.broadcast %59 : vector<16x1xi1> to vector<16x16xi1>
    %61 = vector.broadcast %cst_22 : f32 to vector<16x16xf32>
    %62 = arith.select %60, %49, %61 : vector<16x16xi1>, vector<16x16xf32>
    %63 = arith.truncf %62 : vector<16x16xf32> to vector<16x16xbf16>
    %c2 = arith.constant 2 : index
    %c0_23 = arith.constant 0 : index
    %c0_24 = arith.constant 0 : index
    %64 = vector.load %arg2[%c2, %c0_23, %c0_24] : memref<3x16x32xbf16, #tpu.memory_space<vmem>>, vector<1x16x32xbf16>
    %65 = vector.shape_cast %64 : vector<1x16x32xbf16> to vector<16x32xbf16>
    %cst_25 = arith.constant dense<0.000000e+00> : vector<16x32xf32>
    %66 = tpu.matmul %63, %65, %cst_25 {dimension_numbers = #tpu.dot_dimension_numbers<[1], [0], [0], [1], [0, 0, 1, 1], [], []>} : vector<16x16xbf16>, vector<16x32xbf16>, vector<16x32xf32> -> vector<16x32xf32>
    %67 = arith.addf %48, %66 : vector<16x32xf32>
    %c0_26 = arith.constant 0 : index
    %c0_27 = arith.constant 0 : index
    %68 = vector.load %arg3[%c0_26, %c0_27] : memref<1x32xf32, #tpu.memory_space<vmem>>, vector<1x32xf32>
    %69 = vector.broadcast %68 : vector<1x32xf32> to vector<16x32xf32>
    %70 = arith.addf %67, %69 : vector<16x32xf32>
    %cst_28 = arith.constant 0.000000e+00 : f32
    %71 = vector.broadcast %cst_28 : f32 to vector<16x32xf32>
    %72 = arith.maximumf %70, %71 : vector<16x32xf32>
    %c2_i32 = arith.constant 2 : i32
    %73 = tpu.dynamic_rotate %72 by %c2_i32 dim 0 : vector<16x32xf32>, i32 -> vector<16x32xf32>
    %c-2_i32 = arith.constant -2 : i32
    %74 = vector.broadcast %c-2_i32 : i32 to vector<16x1xi32>
    %75 = arith.addi %25, %74 : vector<16x1xi32>
    %c0_i32_29 = arith.constant 0 : i32
    %76 = vector.broadcast %c0_i32_29 : i32 to vector<16x1xi32>
    %77 = arith.cmpi sge, %75, %76 : vector<16x1xi32>
    %c-2_i32_30 = arith.constant -2 : i32
    %78 = vector.broadcast %c-2_i32_30 : i32 to vector<16x1xi32>
    %79 = arith.addi %25, %78 : vector<16x1xi32>
    %c8_i32_31 = arith.constant 8 : i32
    %80 = vector.broadcast %c8_i32_31 : i32 to vector<16x1xi32>
    %81 = arith.cmpi slt, %79, %80 : vector<16x1xi32>
    %82 = arith.andi %77, %81 : vector<16x1xi1>
    %cst_32 = arith.constant 0.000000e+00 : f32
    %83 = vector.shape_cast %82 : vector<16x1xi1> to vector<16x1xi1>
    %84 = vector.broadcast %83 : vector<16x1xi1> to vector<16x32xi1>
    %85 = vector.broadcast %cst_32 : f32 to vector<16x32xf32>
    %86 = arith.select %84, %73, %85 : vector<16x32xi1>, vector<16x32xf32>
    %87 = arith.truncf %86 : vector<16x32xf32> to vector<16x32xbf16>
    %c0_33 = arith.constant 0 : index
    %c0_34 = arith.constant 0 : index
    %c0_35 = arith.constant 0 : index
    %88 = vector.load %arg4[%c0_33, %c0_34, %c0_35] : memref<3x32x32xbf16, #tpu.memory_space<vmem>>, vector<1x32x32xbf16>
    %89 = vector.shape_cast %88 : vector<1x32x32xbf16> to vector<32x32xbf16>
    %cst_36 = arith.constant dense<0.000000e+00> : vector<16x32xf32>
    %90 = tpu.matmul %87, %89, %cst_36 {dimension_numbers = #tpu.dot_dimension_numbers<[1], [0], [0], [1], [0, 0, 1, 1], [], []>} : vector<16x32xbf16>, vector<32x32xbf16>, vector<16x32xf32> -> vector<16x32xf32>
    %91 = arith.truncf %72 : vector<16x32xf32> to vector<16x32xbf16>
    %c1_37 = arith.constant 1 : index
    %c0_38 = arith.constant 0 : index
    %c0_39 = arith.constant 0 : index
    %92 = vector.load %arg4[%c1_37, %c0_38, %c0_39] : memref<3x32x32xbf16, #tpu.memory_space<vmem>>, vector<1x32x32xbf16>
    %93 = vector.shape_cast %92 : vector<1x32x32xbf16> to vector<32x32xbf16>
    %cst_40 = arith.constant dense<0.000000e+00> : vector<16x32xf32>
    %94 = tpu.matmul %91, %93, %cst_40 {dimension_numbers = #tpu.dot_dimension_numbers<[1], [0], [0], [1], [0, 0, 1, 1], [], []>} : vector<16x32xbf16>, vector<32x32xbf16>, vector<16x32xf32> -> vector<16x32xf32>
    %95 = arith.addf %90, %94 : vector<16x32xf32>
    %c14_i32 = arith.constant 14 : i32
    %96 = tpu.dynamic_rotate %72 by %c14_i32 dim 0 : vector<16x32xf32>, i32 -> vector<16x32xf32>
    %c2_i32_41 = arith.constant 2 : i32
    %97 = vector.broadcast %c2_i32_41 : i32 to vector<16x1xi32>
    %98 = arith.addi %25, %97 : vector<16x1xi32>
    %c0_i32_42 = arith.constant 0 : i32
    %99 = vector.broadcast %c0_i32_42 : i32 to vector<16x1xi32>
    %100 = arith.cmpi sge, %98, %99 : vector<16x1xi32>
    %c2_i32_43 = arith.constant 2 : i32
    %101 = vector.broadcast %c2_i32_43 : i32 to vector<16x1xi32>
    %102 = arith.addi %25, %101 : vector<16x1xi32>
    %c8_i32_44 = arith.constant 8 : i32
    %103 = vector.broadcast %c8_i32_44 : i32 to vector<16x1xi32>
    %104 = arith.cmpi slt, %102, %103 : vector<16x1xi32>
    %105 = arith.andi %100, %104 : vector<16x1xi1>
    %cst_45 = arith.constant 0.000000e+00 : f32
    %106 = vector.shape_cast %105 : vector<16x1xi1> to vector<16x1xi1>
    %107 = vector.broadcast %106 : vector<16x1xi1> to vector<16x32xi1>
    %108 = vector.broadcast %cst_45 : f32 to vector<16x32xf32>
    %109 = arith.select %107, %96, %108 : vector<16x32xi1>, vector<16x32xf32>
    %110 = arith.truncf %109 : vector<16x32xf32> to vector<16x32xbf16>
    %c2_46 = arith.constant 2 : index
    %c0_47 = arith.constant 0 : index
    %c0_48 = arith.constant 0 : index
    %111 = vector.load %arg4[%c2_46, %c0_47, %c0_48] : memref<3x32x32xbf16, #tpu.memory_space<vmem>>, vector<1x32x32xbf16>
    %112 = vector.shape_cast %111 : vector<1x32x32xbf16> to vector<32x32xbf16>
    %cst_49 = arith.constant dense<0.000000e+00> : vector<16x32xf32>
    %113 = tpu.matmul %110, %112, %cst_49 {dimension_numbers = #tpu.dot_dimension_numbers<[1], [0], [0], [1], [0, 0, 1, 1], [], []>} : vector<16x32xbf16>, vector<32x32xbf16>, vector<16x32xf32> -> vector<16x32xf32>
    %114 = arith.addf %95, %113 : vector<16x32xf32>
    %c0_50 = arith.constant 0 : index
    %c0_51 = arith.constant 0 : index
    %115 = vector.load %arg5[%c0_50, %c0_51] : memref<1x32xf32, #tpu.memory_space<vmem>>, vector<1x32xf32>
    %116 = vector.broadcast %115 : vector<1x32xf32> to vector<16x32xf32>
    %117 = arith.addf %114, %116 : vector<16x32xf32>
    %cst_52 = arith.constant 0.000000e+00 : f32
    %118 = vector.broadcast %cst_52 : f32 to vector<16x32xf32>
    %119 = arith.maximumf %117, %118 : vector<16x32xf32>
    %120 = arith.truncf %8 : vector<16x16xf32> to vector<16x16xbf16>
    %c0_53 = arith.constant 0 : index
    %c0_54 = arith.constant 0 : index
    %121 = vector.load %arg6[%c0_53, %c0_54] : memref<16x512xbf16, #tpu.memory_space<vmem>>, vector<16x512xbf16>
    %cst_55 = arith.constant dense<0.000000e+00> : vector<16x512xf32>
    %122 = tpu.matmul %120, %121, %cst_55 {dimension_numbers = #tpu.dot_dimension_numbers<[1], [0], [0], [1], [0, 0, 1, 1], [], []>} : vector<16x16xbf16>, vector<16x512xbf16>, vector<16x512xf32> -> vector<16x512xf32>
    %123 = arith.truncf %119 : vector<16x32xf32> to vector<16x32xbf16>
    %c0_56 = arith.constant 0 : index
    %c0_57 = arith.constant 0 : index
    %124 = vector.load %arg7[%c0_56, %c0_57] : memref<32x512xbf16, #tpu.memory_space<vmem>>, vector<32x512xbf16>
    %cst_58 = arith.constant dense<0.000000e+00> : vector<16x512xf32>
    %125 = tpu.matmul %123, %124, %cst_58 {dimension_numbers = #tpu.dot_dimension_numbers<[1], [0], [0], [1], [0, 0, 1, 1], [], []>} : vector<16x32xbf16>, vector<32x512xbf16>, vector<16x512xf32> -> vector<16x512xf32>
    %126 = arith.addf %122, %125 : vector<16x512xf32>
    %c0_59 = arith.constant 0 : index
    %c0_60 = arith.constant 0 : index
    %127 = vector.load %arg9[%c0_59, %c0_60] : memref<1x512xf32, #tpu.memory_space<vmem>>, vector<1x512xf32>
    %128 = vector.broadcast %127 : vector<1x512xf32> to vector<16x512xf32>
    %129 = arith.addf %126, %128 : vector<16x512xf32>
    %c0_61 = arith.constant 0 : index
    %c0_62 = arith.constant 0 : index
    %130 = vector.load %arg8[%c0_61, %c0_62] : memref<128x512xbf16, #tpu.memory_space<vmem>>, vector<128x512xbf16>
    %c0_63 = arith.constant 0 : index
    %c0_64 = arith.constant 0 : index
    %131 = vector.load %arg12[%c0_63, %c0_64] : memref<8x128xf32, #tpu.memory_space<vmem>>, vector<8x128xf32>
    %c0_65 = arith.constant 0 : index
    %c0_66 = arith.constant 0 : index
    %132 = vector.load %arg13[%c0_65, %c0_66] : memref<8x128xf32, #tpu.memory_space<vmem>>, vector<8x128xf32>
    %133 = vector.extract_strided_slice %129 {offsets = [0, 0], sizes = [8, 512], strides = [1, 1]} : vector<16x512xf32> to vector<8x512xf32>
    %134 = arith.truncf %131 : vector<8x128xf32> to vector<8x128xbf16>
    %cst_67 = arith.constant dense<0.000000e+00> : vector<8x512xf32>
    %135 = tpu.matmul %134, %130, %cst_67 {dimension_numbers = #tpu.dot_dimension_numbers<[1], [0], [0], [1], [0, 0, 1, 1], [], []>} : vector<8x128xbf16>, vector<128x512xbf16>, vector<8x512xf32> -> vector<8x512xf32>
    %136 = arith.addf %133, %135 : vector<8x512xf32>
    %137 = vector.extract_strided_slice %136 {offsets = [0, 0], sizes = [8, 384], strides = [1, 1]} : vector<8x512xf32> to vector<8x384xf32>
    %138 = arith.negf %137 : vector<8x384xf32>
    %139 = math.exp %138 : vector<8x384xf32>
    %cst_68 = arith.constant 1.000000e+00 : f32
    %140 = vector.broadcast %cst_68 : f32 to vector<8x384xf32>
    %141 = arith.addf %140, %139 : vector<8x384xf32>
    %142 = arith.divf %140, %141 : vector<8x384xf32>
    %143 = vector.extract_strided_slice %142 {offsets = [0, 0], sizes = [8, 128], strides = [1, 1]} : vector<8x384xf32> to vector<8x128xf32>
    %144 = vector.extract_strided_slice %142 {offsets = [0, 128], sizes = [8, 128], strides = [1, 1]} : vector<8x384xf32> to vector<8x128xf32>
    %145 = vector.extract_strided_slice %142 {offsets = [0, 256], sizes = [8, 128], strides = [1, 1]} : vector<8x384xf32> to vector<8x128xf32>
    %146 = vector.extract_strided_slice %136 {offsets = [0, 384], sizes = [8, 128], strides = [1, 1]} : vector<8x512xf32> to vector<8x128xf32>
    %147 = math.tanh %146 : vector<8x128xf32>
    %148 = arith.mulf %144, %132 : vector<8x128xf32>
    %149 = arith.mulf %143, %147 : vector<8x128xf32>
    %150 = arith.addf %148, %149 : vector<8x128xf32>
    %151 = math.tanh %150 : vector<8x128xf32>
    %152 = arith.mulf %145, %151 : vector<8x128xf32>
    %153 = vector.extract_strided_slice %129 {offsets = [8, 0], sizes = [8, 512], strides = [1, 1]} : vector<16x512xf32> to vector<8x512xf32>
    %154 = arith.truncf %152 : vector<8x128xf32> to vector<8x128xbf16>
    %cst_69 = arith.constant dense<0.000000e+00> : vector<8x512xf32>
    %155 = tpu.matmul %154, %130, %cst_69 {dimension_numbers = #tpu.dot_dimension_numbers<[1], [0], [0], [1], [0, 0, 1, 1], [], []>} : vector<8x128xbf16>, vector<128x512xbf16>, vector<8x512xf32> -> vector<8x512xf32>
    %156 = arith.addf %153, %155 : vector<8x512xf32>
    %157 = vector.extract_strided_slice %156 {offsets = [0, 0], sizes = [8, 384], strides = [1, 1]} : vector<8x512xf32> to vector<8x384xf32>
    %158 = arith.negf %157 : vector<8x384xf32>
    %159 = math.exp %158 : vector<8x384xf32>
    %cst_70 = arith.constant 1.000000e+00 : f32
    %160 = vector.broadcast %cst_70 : f32 to vector<8x384xf32>
    %161 = arith.addf %160, %159 : vector<8x384xf32>
    %162 = arith.divf %160, %161 : vector<8x384xf32>
    %163 = vector.extract_strided_slice %162 {offsets = [0, 0], sizes = [8, 128], strides = [1, 1]} : vector<8x384xf32> to vector<8x128xf32>
    %164 = vector.extract_strided_slice %162 {offsets = [0, 128], sizes = [8, 128], strides = [1, 1]} : vector<8x384xf32> to vector<8x128xf32>
    %165 = vector.extract_strided_slice %162 {offsets = [0, 256], sizes = [8, 128], strides = [1, 1]} : vector<8x384xf32> to vector<8x128xf32>
    %166 = vector.extract_strided_slice %156 {offsets = [0, 384], sizes = [8, 128], strides = [1, 1]} : vector<8x512xf32> to vector<8x128xf32>
    %167 = math.tanh %166 : vector<8x128xf32>
    %168 = arith.mulf %164, %150 : vector<8x128xf32>
    %169 = arith.mulf %163, %167 : vector<8x128xf32>
    %170 = arith.addf %168, %169 : vector<8x128xf32>
    %171 = math.tanh %170 : vector<8x128xf32>
    %172 = arith.mulf %165, %171 : vector<8x128xf32>
    %173 = tpu.concatenate %152, %172 in 0 : vector<8x128xf32>, vector<8x128xf32> -> vector<16x128xf32>
    %174 = arith.truncf %173 : vector<16x128xf32> to vector<16x128xbf16>
    %c0_71 = arith.constant 0 : index
    %c0_72 = arith.constant 0 : index
    %175 = vector.load %arg10[%c0_71, %c0_72] : memref<128x128xbf16, #tpu.memory_space<vmem>>, vector<128x128xbf16>
    %cst_73 = arith.constant dense<0.000000e+00> : vector<16x128xf32>
    %176 = tpu.matmul %174, %175, %cst_73 {dimension_numbers = #tpu.dot_dimension_numbers<[1], [0], [0], [1], [0, 0, 1, 1], [], []>} : vector<16x128xbf16>, vector<128x128xbf16>, vector<16x128xf32> -> vector<16x128xf32>
    %c0_74 = arith.constant 0 : index
    %c0_75 = arith.constant 0 : index
    %177 = vector.load %arg11[%c0_74, %c0_75] : memref<1x128xf32, #tpu.memory_space<vmem>>, vector<1x128xf32>
    %178 = vector.broadcast %177 : vector<1x128xf32> to vector<16x128xf32>
    %179 = arith.addf %176, %178 : vector<16x128xf32>
    %cst_76 = arith.constant dense<0xFF800000> : vector<16xf32>
    %180 = vector.multi_reduction <maximumf>, %179, %cst_76 [1] : vector<16x128xf32> to vector<16xf32>
    %181 = vector.shape_cast %180 : vector<16xf32> to vector<16x1xf32>
    %182 = vector.broadcast %181 : vector<16x1xf32> to vector<16x128xf32>
    %183 = arith.subf %179, %182 : vector<16x128xf32>
    %184 = math.exp %183 : vector<16x128xf32>
    %cst_77 = arith.constant dense<0.000000e+00> : vector<16xf32>
    %185 = vector.multi_reduction <add>, %184, %cst_77 [1] : vector<16x128xf32> to vector<16xf32>
    %186 = vector.shape_cast %185 : vector<16xf32> to vector<16x1xf32>
    %187 = math.log %186 : vector<16x1xf32>
    %188 = vector.broadcast %187 : vector<16x1xf32> to vector<16x128xf32>
    %189 = arith.subf %183, %188 : vector<16x128xf32>
    %c0_78 = arith.constant 0 : index
    %c0_79 = arith.constant 0 : index
    %190 = vector.load %arg14[%c0_78, %c0_79] : memref<16x128xf32, #tpu.memory_space<vmem>>, vector<16x128xf32>
    tpu.vector_store %arg14[%c0_78, %c0_79], %189 {strides = array<i32>} : memref<16x128xf32, #tpu.memory_space<vmem>>, vector<16x128xf32>,
    return
  }
}

</mosaic_0001>

<llo_original>
// kernel: _lambda_.1
$region0: #{_lambda_.1}
  #allocation0 [shape = 'u32[]', space=smem, size = 0x4, offset = 0x4, fixed_abs, tag = 'smem constant byte address 0x4 - core index']
  #allocation1 [shape = 'u32[144,128]{1,0:T(1,128)}', space=vmem, size = 0x12000, scoped, tag = 'internal scratch']
  %s0 = inlined_call_operand.vmem [shape: s32[16,1], index: 0, kind: input, shape index: {}]
  %s1 = inlined_call_operand.hbm [shape: bf16[32,16], index: 1, kind: input, shape index: {}]
  %s2 = inlined_call_operand.hbm [shape: bf16[3,16,32], index: 2, kind: input, shape index: {}]
  %s3 = inlined_call_operand.vmem [shape: f32[1,32], index: 3, kind: input, shape index: {}]
  %s4 = inlined_call_operand.hbm [shape: bf16[3,32,32], index: 4, kind: input, shape index: {}]
  %s5 = inlined_call_operand.vmem [shape: f32[1,32], index: 5, kind: input, shape index: {}]
  %s6 = inlined_call_operand.vmem [shape: bf16[16,512], index: 6, kind: input, shape index: {}]
  %s7 = inlined_call_operand.vmem [shape: bf16[32,512], index: 7, kind: input, shape index: {}]
  %s8 = inlined_call_operand.hbm [shape: bf16[128,512], index: 8, kind: input, shape index: {}]
  %s9 = inlined_call_operand.vmem [shape: f32[1,512], index: 9, kind: input, shape index: {}]
  %s10 = inlined_call_operand.vmem [shape: bf16[128,128], index: 10, kind: input, shape index: {}]
  %s11 = inlined_call_operand.vmem [shape: f32[1,128], index: 11, kind: input, shape index: {}]
  %s12 = inlined_call_operand.vmem [shape: f32[8,128], index: 12, kind: input, shape index: {}]
  %s13 = inlined_call_operand.vmem [shape: f32[8,128], index: 13, kind: input, shape index: {}]
  %s14 = inlined_call_operand.hbm [shape: f32[16,128], index: 14, kind: output, shape index: {}]
  %s15 = sld [smem:[#allocation0]]
  $region82: #{_lambda_.1} parent=0
    _
  %s17 = ssub.s32 1, %s15
  %s18 = scalar_select 0, %s17, %s15
  $region1: #{_lambda_.1} parent=0
    #allocation2 [shape = 'u8[8192]{0}', space=vmem, size = 0x2000, scoped, tag = 'input window, operand 1, single buffered']
    #allocation3 [shape = 's32[1]{0}', space=sflag, size = 0x4, scoped, tag = 'scoped memory for _lambda_.1']
    #allocation4 [shape = 's32[1]{0}', space=sflag, size = 0x4, scoped, tag = 'scoped memory for _lambda_.1']
    #allocation5 [shape = 'u8[12288]{0}', space=vmem, size = 0x3000, scoped, tag = 'input window, operand 2, single buffered']
    #allocation6 [shape = 's32[1]{0}', space=sflag, size = 0x4, scoped, tag = 'scoped memory for _lambda_.1']
    #allocation7 [shape = 'u8[24576]{0}', space=vmem, size = 0x6000, scoped, tag = 'input window, operand 4, single buffered']
    #allocation8 [shape = 'u8[131072]{0}', space=vmem, size = 0x20000, scoped, tag = 'input window, operand 8, single buffered']
    #allocation9 [shape = 's32[1]{0}', space=sflag, size = 0x4, scoped, tag = 'scoped memory for _lambda_.1']
    #allocation10 [shape = 'u8[8192]{0}', space=vmem, size = 0x2000, scoped, tag = 'output window, operand 0, single buffered']
    %19 = vsyncpa [#allocation3], 0
    %20 = vsyncpa [#allocation6], 0
    %21 = vsyncpa [#allocation9], 0
    %22 = vsyncpa [#allocation4], 0
    // Predicated region
    $region2: #{_lambda_.1} parent=1 // pred_check
      _
    $region3: #{_lambda_.1} parent=1 // pred_check_branch
      %24 = sbr.rel (0) target = $region5
    $region4: #{_lambda_.1} parent=1 // pred_region
      _
    $region5: #{_lambda_.1} parent=1 // pred_fallthru
      _
    // Predicated region
    $region6: #{_lambda_.1} parent=1 // pred_check
      _
    $region7: #{_lambda_.1} parent=1 // pred_check_branch
      %26 = sbr.rel (0) target = $region9
    $region8: #{_lambda_.1} parent=1 // pred_region
      %s28 = ssub.s32 256, 256
      %29 = vsyncadd [#allocation3], %s28
      %s30 = sshll.u32 [#allocation2], 4
      %s31 = int_to_ptr.vmem [resolvable:$true] %s30
      %36 = dma.hbm_to_vmem [thread:$0]  %s1, 256, %s31, [#allocation3], 64, 64, 4
    $region9: #{_lambda_.1} parent=1 // pred_fallthru
      _
    // Predicated region
    $region10: #{_lambda_.1} parent=1 // pred_check
      _
    $region11: #{_lambda_.1} parent=1 // pred_check_branch
      %38 = sbr.rel (0) target = $region13
    $region12: #{_lambda_.1} parent=1 // pred_region
      %s40 = ssub.s32 384, 384
      %41 = vsyncadd [#allocation6], %s40
      %s42 = sshll.u32 [#allocation5], 4
      %s43 = int_to_ptr.vmem [resolvable:$true] %s42
      %48 = dma.hbm_to_vmem [thread:$0]  %s2, 384, %s43, [#allocation6], 64, 64, 4
    $region13: #{_lambda_.1} parent=1 // pred_fallthru
      _
    // Predicated region
    $region14: #{_lambda_.1} parent=1 // pred_check
      _
    $region15: #{_lambda_.1} parent=1 // pred_check_branch
      %50 = sbr.rel (0) target = $region17
    $region16: #{_lambda_.1} parent=1 // pred_region
      _
    $region17: #{_lambda_.1} parent=1 // pred_fallthru
      _
    // Predicated region
    $region18: #{_lambda_.1} parent=1 // pred_check
      _
    $region19: #{_lambda_.1} parent=1 // pred_check_branch
      %52 = sbr.rel (0) target = $region21
    $region20: #{_lambda_.1} parent=1 // pred_region
      %s54 = ssub.s32 768, 768
      %55 = vsyncadd [#allocation6], %s54
      %s56 = sshll.u32 [#allocation7], 4
      %s57 = int_to_ptr.vmem [resolvable:$true] %s56
      %62 = dma.hbm_to_vmem [thread:$0]  %s4, 768, %s57, [#allocation6], 64, 64, 4
    $region21: #{_lambda_.1} parent=1 // pred_fallthru
      _
    // Predicated region
    $region22: #{_lambda_.1} parent=1 // pred_check
      _
    $region23: #{_lambda_.1} parent=1 // pred_check_branch
      %64 = sbr.rel (0) target = $region25
    $region24: #{_lambda_.1} parent=1 // pred_region
      _
    $region25: #{_lambda_.1} parent=1 // pred_fallthru
      _
    // Predicated region
    $region26: #{_lambda_.1} parent=1 // pred_check
      _
    $region27: #{_lambda_.1} parent=1 // pred_check_branch
      %66 = sbr.rel (0) target = $region29
    $region28: #{_lambda_.1} parent=1 // pred_region
      _
    $region29: #{_lambda_.1} parent=1 // pred_fallthru
      _
    // Predicated region
    $region30: #{_lambda_.1} parent=1 // pred_check
      _
    $region31: #{_lambda_.1} parent=1 // pred_check_branch
      %68 = sbr.rel (0) target = $region33
    $region32: #{_lambda_.1} parent=1 // pred_region
      _
    $region33: #{_lambda_.1} parent=1 // pred_fallthru
      _
    // Predicated region
    $region34: #{_lambda_.1} parent=1 // pred_check
      _
    $region35: #{_lambda_.1} parent=1 // pred_check_branch
      %70 = sbr.rel (0) target = $region37
    $region36: #{_lambda_.1} parent=1 // pred_region
      %s72 = ssub.s32 4096, 4096
      %73 = vsyncadd [#allocation9], %s72
      %s74 = sshll.u32 [#allocation8], 4
      %s75 = int_to_ptr.vmem [resolvable:$true] %s74
      %80 = dma.hbm_to_vmem [thread:$0]  %s8, 4096, %s75, [#allocation9], 256, 256, 16
    $region37: #{_lambda_.1} parent=1 // pred_fallthru
      _
    // Predicated region
    $region38: #{_lambda_.1} parent=1 // pred_check
      _
    $region39: #{_lambda_.1} parent=1 // pred_check_branch
      %82 = sbr.rel (0) target = $region41
    $region40: #{_lambda_.1} parent=1 // pred_region
      _
    $region41: #{_lambda_.1} parent=1 // pred_fallthru
      _
    // Predicated region
    $region42: #{_lambda_.1} parent=1 // pred_check
      _
    $region43: #{_lambda_.1} parent=1 // pred_check_branch
      %84 = sbr.rel (0) target = $region45
    $region44: #{_lambda_.1} parent=1 // pred_region
      _
    $region45: #{_lambda_.1} parent=1 // pred_fallthru
      _
    // Predicated region
    $region46: #{_lambda_.1} parent=1 // pred_check
      _
    $region47: #{_lambda_.1} parent=1 // pred_check_branch
      %86 = sbr.rel (0) target = $region49
    $region48: #{_lambda_.1} parent=1 // pred_region
      _
    $region49: #{_lambda_.1} parent=1 // pred_fallthru
      _
    // Predicated region
    $region50: #{_lambda_.1} parent=1 // pred_check
      _
    $region51: #{_lambda_.1} parent=1 // pred_check_branch
      %88 = sbr.rel (0) target = $region53
    $region52: #{_lambda_.1} parent=1 // pred_region
      _
    $region53: #{_lambda_.1} parent=1 // pred_fallthru
      _
    // Predicated region
    $region54: #{_lambda_.1} parent=1 // pred_check
      _
    $region55: #{_lambda_.1} parent=1 // pred_check_branch
      %90 = sbr.rel (0) target = $region57
    $region56: #{_lambda_.1} parent=1 // pred_region
      _
    $region57: #{_lambda_.1} parent=1 // pred_fallthru
      _
    // Predicated region
    $region58: #{_lambda_.1} parent=1 // pred_check
      _
    $region59: #{_lambda_.1} parent=1 // pred_check_branch
      %92 = sbr.rel (0) target = $region61
    $region60: #{_lambda_.1} parent=1 // pred_region
      %93 = dma.done [#allocation3], 256
    $region61: #{_lambda_.1} parent=1 // pred_fallthru
      _
    // Predicated region
    $region62: #{_lambda_.1} parent=1 // pred_check
      _
    $region63: #{_lambda_.1} parent=1 // pred_check_branch
      %95 = sbr.rel (0) target = $region65
    $region64: #{_lambda_.1} parent=1 // pred_region
      %96 = dma.done [#allocation6], 384
    $region65: #{_lambda_.1} parent=1 // pred_fallthru
      _
    // Predicated region
    $region66: #{_lambda_.1} parent=1 // pred_check
      _
    $region67: #{_lambda_.1} parent=1 // pred_check_branch
      %98 = sbr.rel (0) target = $region69
    $region68: #{_lambda_.1} parent=1 // pred_region
      %99 = dma.done [#allocation6], 768
    $region69: #{_lambda_.1} parent=1 // pred_fallthru
      _
    // Predicated region
    $region70: #{_lambda_.1} parent=1 // pred_check
      _
    $region71: #{_lambda_.1} parent=1 // pred_check_branch
      %101 = sbr.rel (0) target = $region73
    $region72: #{_lambda_.1} parent=1 // pred_region
      %102 = dma.done [#allocation9], 4096
    $region73: #{_lambda_.1} parent=1 // pred_fallthru
      _
    %v104 = vld [vmem:[%s0] sm:$0xff]
    %v105 = vld [vmem:[%s0 + $0x8] sm:$0xff]
    %v106 = vlaneseq
    %v107 = vand.u32 %v106, 127
    %108 = vset.pattern.permute.xlu0 0
    %109 = vperm.xlu0 %108, %v104
    %v110 = vpop.permute.xlu0 %109
    %111 = vset.pattern.permute.xlu0 0
    %112 = vperm.xlu0 %111, %v105
    %v113 = vpop.permute.xlu0 %112
    %vm114 = vcmp.eq.s32.totalorder %v107, %v110
    %vm115 = vcmp.eq.s32.totalorder %v107, %v113
    %v116 = vsel %vm114, 1, 0
    %v117 = vsel %vm115, 1, 0
    %v118 = vcvt.s32.f32 %v116
    %v119 = vcvt.s32.f32 %v117
    %v120 = vpack.c.bf16 %v119, %v118
    %v121 = vld [vmem:[#allocation2] sm:$0xf]
    %v122 = vld [vmem:[#allocation2 + $0x4] sm:$0xf]
    %v123 = vld [vmem:[#allocation2 + $0x8] sm:$0xf]
    %v124 = vld [vmem:[#allocation2 + $0xc] sm:$0xf]
    %v129 = vunpack.c.l.b16 %v121
    %v130 = vunpack.c.l.b16 %v122
    %v131 = vunpack.c.l.b16 %v123
    %v132 = vunpack.c.l.b16 %v124
    %v133 = vpack.c.b16 %v130, %v129
    %v134 = vpack.c.b16 %v132, %v131
    %vm137 = vcmask 261120
    %v139 = vsel %vm137, %v120, 0
    %141 = vmatprep.subr.bf16.mxu0 0
    %142 = vmatpush1.bf16.msra.mxu0 0
    %143 = vmatprep.subr.bf16.mxu0 0
    %144 = vmatpush1.bf16.msra.mxu0 0
    %145 = vmatprep.subr.bf16.mxu0 0
    %146 = vmatpush1.bf16.msra.mxu0 0
    %147 = vmatprep.subr.bf16.mxu0 0
    %148 = vmatpush1.bf16.msra.mxu0 0
    %149 = vmatprep.subr.bf16.mxu0 0
    %150 = vmatpush1.bf16.msra.mxu0 0
    %151 = vmatprep.subr.bf16.mxu0 0
    %152 = vmatpush1.bf16.msra.mxu0 0
    %153 = vmatprep.subr.bf16.mxu0 0
    %154 = vmatpush1.bf16.msra.mxu0 %v134
    %155 = vmatprep.subr.bf16.mxu0 0
    %156 = vmatpush1.bf16.msra.mxu0 %v133
    %157 = vmatprep.subr.bf16.mxu0 0
    %158 = vmatpush2.bf16.msra.mxu0 0
    %159 = vmatprep.subr.bf16.mxu0 0
    %160 = vmatpush2.bf16.msra.mxu0 0
    %161 = vmatprep.subr.bf16.mxu0 0
    %162 = vmatpush2.bf16.msra.mxu0 0
    %163 = vmatprep.subr.bf16.mxu0 0
    %164 = vmatpush2.bf16.msra.mxu0 0
    %165 = vmatprep.subr.bf16.mxu0 0
    %166 = vmatpush2.bf16.msra.mxu0 0
    %167 = vmatprep.subr.bf16.mxu0 0
    %168 = vmatpush2.bf16.msra.mxu0 0
    %169 = vmatprep.subr.bf16.mxu0 0
    %170 = vmatpush2.bf16.msra.mxu0 0
    %171 = vmatprep.subr.bf16.mxu0 0
    %172 = vmatpush2.bf16.msra.mxu0 0
    %173 = vmatprep.mubr.bf16.mxu0 0
    %174 = vmatmul.mubr.bf16.gmra.mxu0 %v139
    %v175 = vpop.f32.mrf.mxu0
    %v176 = vadd.f32 0.0, %v175
    %v177 = vpop.f32.mrf.mxu0
    %v178 = vpop.f32.mrf.mxu0
    %v179 = vadd.f32 0.0, %v178
    %v180 = vpop.f32.mrf.mxu0
    %181 = vdwg.mxu0
    %v182 = vlaneseq
    %v183 = vshrl.u32 %v182, 7
    %v184 = vadd.s32 %v183, 8
    %vm185 = vcmp.lt.s32.totalorder %v183, 0
    %v186 = vsub.s32 0, %v183
    %v187 = vsel %vm185, %v186, %v183
    %v188 = vshrl.u32 %v187, 3
    %v189 = vand.u32 %v187, 7
    %v190 = vsub.s32 0, %v189
    %v191 = vsel %vm185, %v190, %v189
    %vm192 = vcmp.lt.s32.totalorder %v184, 0
    %v193 = vsub.s32 0, %v184
    %v194 = vsel %vm192, %v193, %v184
    %v195 = vshrl.u32 %v194, 3
    %v196 = vand.u32 %v194, 7
    %v197 = vsub.s32 0, %v196
    %v198 = vsel %vm192, %v197, %v196
    %vm199 = vcmp.ne.s32.totalorder %v191, 0
    %vm200 = vcmp.ne.s32.totalorder %v198, 0
    %vm201 = vcmp.lt.s32.totalorder %v191, 0
    %vm202 = vcmp.lt.s32.totalorder %v198, 0
    %vm203 = vmand %vm201, %vm199
    %vm204 = vmand %vm202, %vm200
    %v205 = vadd.s32 %v191, 8
    %v206 = vadd.s32 %v198, 8
    %v207 = vsel %vm203, %v205, %v191
    %v208 = vsel %vm204, %v206, %v198
    %v209 = vrot.slane %v176, 7
    %v210 = vrot.slane %v179, 7
    %vm211 = vcmp.lt.s32.totalorder %v183, 1
    %v212 = vsel %vm211, %v209, %v210
    %v213 = vsel %vm211, %v210, %v209
    %v214 = vadd.s32 %v207, 4294967295
    %v215 = vadd.s32 %v208, 4294967295
    %vm216 = vcmp.ge.s32.totalorder %v214, 0
    %vm217 = vcmp.ge.s32.totalorder %v215, 0
    %vm218 = vcmp.lt.s32.totalorder %v214, 8
    %vm219 = vcmp.lt.s32.totalorder %v215, 8
    %vm220 = vmand %vm216, %vm218
    %vm221 = vmand %vm217, %vm219
    %v222 = vsel %vm220, 1, 0
    %v223 = vsel %vm221, 1, 0
    %vm224 = vcmp.eq.s32.totalorder %v222, 1
    %vm225 = vcmp.eq.s32.totalorder %v223, 1
    %v226 = vsel %vm224, %v213, 0.0
    %v227 = vsel %vm225, %v212, 0.0
    %v228 = vpack.c.bf16 %v227, %v226
    %v229 = vld [vmem:[#allocation5] sm:$0xf]
    %v230 = vld [vmem:[#allocation5 + $0x4] sm:$0xf]
    %v231 = vpack.c.bf16 %v179, %v176
    %s232 = scalar_lea.vmem [#allocation5], 8
    %v233 = vld [vmem:[%s232] sm:$0xf]
    %v234 = vld [vmem:[%s232 + $0x4] sm:$0xf]
    %v237 = vunpack.c.l.b16 %v233
    %v238 = vunpack.c.l.b16 %v234
    %v239 = vpack.c.b16 %v238, %v237
    %vm241 = vcmask 130048
    %v243 = vsel %vm241, %v231, 0
    %245 = vmatprep.subr.bf16.mxu0 0
    %246 = vmatpush1.bf16.msra.mxu0 0
    %247 = vmatprep.subr.bf16.mxu0 0
    %248 = vmatpush1.bf16.msra.mxu0 0
    %249 = vmatprep.subr.bf16.mxu0 0
    %250 = vmatpush1.bf16.msra.mxu0 0
    %251 = vmatprep.subr.bf16.mxu0 0
    %252 = vmatpush1.bf16.msra.mxu0 0
    %253 = vmatprep.subr.bf16.mxu0 0
    %254 = vmatpush1.bf16.msra.mxu0 0
    %255 = vmatprep.subr.bf16.mxu0 0
    %256 = vmatpush1.bf16.msra.mxu0 0
    %257 = vmatprep.subr.bf16.mxu0 0
    %258 = vmatpush1.bf16.msra.mxu0 0
    %259 = vmatprep.subr.bf16.mxu0 0
    %260 = vmatpush1.bf16.msra.mxu0 %v239
    %261 = vmatprep.subr.bf16.mxu0 0
    %262 = vmatpush2.bf16.msra.mxu0 0
    %263 = vmatprep.subr.bf16.mxu0 0
    %264 = vmatpush2.bf16.msra.mxu0 0
    %265 = vmatprep.subr.bf16.mxu0 0
    %266 = vmatpush2.bf16.msra.mxu0 0
    %267 = vmatprep.subr.bf16.mxu0 0
    %268 = vmatpush2.bf16.msra.mxu0 0
    %269 = vmatprep.subr.bf16.mxu0 0
    %270 = vmatpush2.bf16.msra.mxu0 0
    %271 = vmatprep.subr.bf16.mxu0 0
    %272 = vmatpush2.bf16.msra.mxu0 0
    %273 = vmatprep.subr.bf16.mxu0 0
    %274 = vmatpush2.bf16.msra.mxu0 0
    %275 = vmatprep.subr.bf16.mxu0 0
    %276 = vmatpush2.bf16.msra.mxu0 0
    %277 = vmatprep.mubr.bf16.mxu0 0
    %278 = vmatmul.mubr.bf16.gmra.mxu0 %v243
    %v279 = vpop.f32.mrf.mxu0
    %v280 = vadd.f32 0.0, %v279
    %v281 = vpop.f32.mrf.mxu0
    %v282 = vpop.f32.mrf.mxu0
    %v283 = vadd.f32 0.0, %v282
    %v284 = vpop.f32.mrf.mxu0
    %285 = vdwg.mxu0
    %v288 = vunpack.c.l.b16 %v229
    %v289 = vunpack.c.l.b16 %v230
    %v290 = vpack.c.b16 %v289, %v288
    %v293 = vsel %vm241, %v228, 0
    %295 = vmatprep.subr.bf16.mxu0 0
    %296 = vmatpush1.bf16.msra.mxu0 0
    %297 = vmatprep.subr.bf16.mxu0 0
    %298 = vmatpush1.bf16.msra.mxu0 0
    %299 = vmatprep.subr.bf16.mxu0 0
    %300 = vmatpush1.bf16.msra.mxu0 0
    %301 = vmatprep.subr.bf16.mxu0 0
    %302 = vmatpush1.bf16.msra.mxu0 0
    %303 = vmatprep.subr.bf16.mxu0 0
    %304 = vmatpush1.bf16.msra.mxu0 0
    %305 = vmatprep.subr.bf16.mxu0 0
    %306 = vmatpush1.bf16.msra.mxu0 0
    %307 = vmatprep.subr.bf16.mxu0 0
    %308 = vmatpush1.bf16.msra.mxu0 0
    %309 = vmatprep.subr.bf16.mxu0 0
    %310 = vmatpush1.bf16.msra.mxu0 %v290
    %311 = vmatprep.subr.bf16.mxu0 0
    %312 = vmatpush2.bf16.msra.mxu0 0
    %313 = vmatprep.subr.bf16.mxu0 0
    %314 = vmatpush2.bf16.msra.mxu0 0
    %315 = vmatprep.subr.bf16.mxu0 0
    %316 = vmatpush2.bf16.msra.mxu0 0
    %317 = vmatprep.subr.bf16.mxu0 0
    %318 = vmatpush2.bf16.msra.mxu0 0
    %319 = vmatprep.subr.bf16.mxu0 0
    %320 = vmatpush2.bf16.msra.mxu0 0
    %321 = vmatprep.subr.bf16.mxu0 0
    %322 = vmatpush2.bf16.msra.mxu0 0
    %323 = vmatprep.subr.bf16.mxu0 0
    %324 = vmatpush2.bf16.msra.mxu0 0
    %325 = vmatprep.subr.bf16.mxu0 0
    %326 = vmatpush2.bf16.msra.mxu0 0
    %327 = vmatprep.mubr.bf16.mxu0 0
    %328 = vmatmul.mubr.bf16.gmra.mxu0 %v293
    %v329 = vpop.f32.mrf.mxu0
    %v330 = vadd.f32 %v280, %v329
    %v331 = vpop.f32.mrf.mxu0
    %v332 = vpop.f32.mrf.mxu0
    %v333 = vadd.f32 %v283, %v332
    %v334 = vpop.f32.mrf.mxu0
    %335 = vdwg.mxu0
    %v336 = vrot.slane %v176, 1
    %v337 = vrot.slane %v179, 1
    %vm338 = vcmp.lt.s32.totalorder %v183, 7
    %v339 = vsel %vm338, %v336, %v337
    %v340 = vsel %vm338, %v337, %v336
    %v341 = vadd.s32 %v207, 1
    %v342 = vadd.s32 %v208, 1
    %vm343 = vcmp.ge.s32.totalorder %v341, 0
    %vm344 = vcmp.ge.s32.totalorder %v342, 0
    %vm345 = vcmp.lt.s32.totalorder %v341, 8
    %vm346 = vcmp.lt.s32.totalorder %v342, 8
    %vm347 = vmand %vm343, %vm345
    %vm348 = vmand %vm344, %vm346
    %v349 = vsel %vm347, 1, 0
    %v350 = vsel %vm348, 1, 0
    %vm351 = vcmp.eq.s32.totalorder %v349, 1
    %vm352 = vcmp.eq.s32.totalorder %v350, 1
    %v353 = vsel %vm351, %v339, 0.0
    %v354 = vsel %vm352, %v340, 0.0
    %v355 = vpack.c.bf16 %v354, %v353
    %s356 = scalar_lea.vmem [#allocation5], 16
    %v357 = vld [vmem:[%s356] sm:$0xf]
    %v358 = vld [vmem:[%s356 + $0x4] sm:$0xf]
    %v361 = vunpack.c.l.b16 %v357
    %v362 = vunpack.c.l.b16 %v358
    %v363 = vpack.c.b16 %v362, %v361
    %v366 = vsel %vm241, %v355, 0
    %368 = vmatprep.subr.bf16.mxu0 0
    %369 = vmatpush1.bf16.msra.mxu0 0
    %370 = vmatprep.subr.bf16.mxu0 0
    %371 = vmatpush1.bf16.msra.mxu0 0
    %372 = vmatprep.subr.bf16.mxu0 0
    %373 = vmatpush1.bf16.msra.mxu0 0
    %374 = vmatprep.subr.bf16.mxu0 0
    %375 = vmatpush1.bf16.msra.mxu0 0
    %376 = vmatprep.subr.bf16.mxu0 0
    %377 = vmatpush1.bf16.msra.mxu0 0
    %378 = vmatprep.subr.bf16.mxu0 0
    %379 = vmatpush1.bf16.msra.mxu0 0
    %380 = vmatprep.subr.bf16.mxu0 0
    %381 = vmatpush1.bf16.msra.mxu0 0
    %382 = vmatprep.subr.bf16.mxu0 0
    %383 = vmatpush1.bf16.msra.mxu0 %v363
    %384 = vmatprep.subr.bf16.mxu0 0
    %385 = vmatpush2.bf16.msra.mxu0 0
    %386 = vmatprep.subr.bf16.mxu0 0
    %387 = vmatpush2.bf16.msra.mxu0 0
    %388 = vmatprep.subr.bf16.mxu0 0
    %389 = vmatpush2.bf16.msra.mxu0 0
    %390 = vmatprep.subr.bf16.mxu0 0
    %391 = vmatpush2.bf16.msra.mxu0 0
    %392 = vmatprep.subr.bf16.mxu0 0
    %393 = vmatpush2.bf16.msra.mxu0 0
    %394 = vmatprep.subr.bf16.mxu0 0
    %395 = vmatpush2.bf16.msra.mxu0 0
    %396 = vmatprep.subr.bf16.mxu0 0
    %397 = vmatpush2.bf16.msra.mxu0 0
    %398 = vmatprep.subr.bf16.mxu0 0
    %399 = vmatpush2.bf16.msra.mxu0 0
    %400 = vmatprep.mubr.bf16.mxu0 0
    %401 = vmatmul.mubr.bf16.gmra.mxu0 %v366
    %v402 = vpop.f32.mrf.mxu0
    %v403 = vadd.f32 0.0, %v402
    %v404 = vpop.f32.mrf.mxu0
    %v405 = vpop.f32.mrf.mxu0
    %v406 = vadd.f32 0.0, %v405
    %v407 = vpop.f32.mrf.mxu0
    %408 = vdwg.mxu0
    %v409 = vadd.f32 %v330, %v403
    %v410 = vadd.f32 %v333, %v406
    %v411 = vld [vmem:[%s3] sm:$0x1]
    %v413 = vlaneseq
    %v414 = vshrl.u32 %v413, 7
    %v415 = vsub.s32 0, %v414
    %v416 = vrot.slane %v411, %v415
    %v418 = vadd.f32 %v409, %v416
    %v419 = vadd.f32 %v410, %v416
    %v420 = vmax.f32 %v418, 0.0
    %v421 = vmax.f32 %v419, 0.0
    %v422 = vrot.slane %v420, 6
    %v423 = vrot.slane %v421, 6
    %vm424 = vcmp.lt.s32.totalorder %v183, 2
    %v425 = vsel %vm424, %v422, %v423
    %v426 = vsel %vm424, %v423, %v422
    %v427 = vadd.s32 %v207, 4294967294
    %v428 = vadd.s32 %v208, 4294967294
    %vm429 = vcmp.ge.s32.totalorder %v427, 0
    %vm430 = vcmp.ge.s32.totalorder %v428, 0
    %vm431 = vcmp.lt.s32.totalorder %v427, 8
    %vm432 = vcmp.lt.s32.totalorder %v428, 8
    %vm433 = vmand %vm429, %vm431
    %vm434 = vmand %vm430, %vm432
    %v435 = vsel %vm433, 1, 0
    %v436 = vsel %vm434, 1, 0
    %vm437 = vcmp.eq.s32.totalorder %v435, 1
    %vm438 = vcmp.eq.s32.totalorder %v436, 1
    %v439 = vsel %vm437, %v426, 0.0
    %v440 = vsel %vm438, %v425, 0.0
    %v441 = vpack.c.bf16 %v440, %v439
    %v442 = vld [vmem:[#allocation7] sm:$0xf]
    %v443 = vld [vmem:[#allocation7 + $0x4] sm:$0xf]
    %v444 = vld [vmem:[#allocation7 + $0x8] sm:$0xf]
    %v445 = vld [vmem:[#allocation7 + $0xc] sm:$0xf]
    %v446 = vpack.c.bf16 %v421, %v420
    %s447 = scalar_lea.vmem [#allocation7], 16
    %v448 = vld [vmem:[%s447] sm:$0xf]
    %v449 = vld [vmem:[%s447 + $0x4] sm:$0xf]
    %v450 = vld [vmem:[%s447 + $0x8] sm:$0xf]
    %v451 = vld [vmem:[%s447 + $0xc] sm:$0xf]
    %v456 = vunpack.c.l.b16 %v448
    %v457 = vunpack.c.l.b16 %v449
    %v458 = vunpack.c.l.b16 %v450
    %v459 = vunpack.c.l.b16 %v451
    %v460 = vpack.c.b16 %v457, %v456
    %v461 = vpack.c.b16 %v459, %v458
    %v465 = vsel %vm137, %v446, 0
    %467 = vmatprep.subr.bf16.mxu0 0
    %468 = vmatpush1.bf16.msra.mxu0 0
    %469 = vmatprep.subr.bf16.mxu0 0
    %470 = vmatpush1.bf16.msra.mxu0 0
    %471 = vmatprep.subr.bf16.mxu0 0
    %472 = vmatpush1.bf16.msra.mxu0 0
    %473 = vmatprep.subr.bf16.mxu0 0
    %474 = vmatpush1.bf16.msra.mxu0 0
    %475 = vmatprep.subr.bf16.mxu0 0
    %476 = vmatpush1.bf16.msra.mxu0 0
    %477 = vmatprep.subr.bf16.mxu0 0
    %478 = vmatpush1.bf16.msra.mxu0 0
    %479 = vmatprep.subr.bf16.mxu0 0
    %480 = vmatpush1.bf16.msra.mxu0 %v461
    %481 = vmatprep.subr.bf16.mxu0 0
    %482 = vmatpush1.bf16.msra.mxu0 %v460
    %483 = vmatprep.subr.bf16.mxu0 0
    %484 = vmatpush2.bf16.msra.mxu0 0
    %485 = vmatprep.subr.bf16.mxu0 0
    %486 = vmatpush2.bf16.msra.mxu0 0
    %487 = vmatprep.subr.bf16.mxu0 0
    %488 = vmatpush2.bf16.msra.mxu0 0
    %489 = vmatprep.subr.bf16.mxu0 0
    %490 = vmatpush2.bf16.msra.mxu0 0
    %491 = vmatprep.subr.bf16.mxu0 0
    %492 = vmatpush2.bf16.msra.mxu0 0
    %493 = vmatprep.subr.bf16.mxu0 0
    %494 = vmatpush2.bf16.msra.mxu0 0
    %495 = vmatprep.subr.bf16.mxu0 0
    %496 = vmatpush2.bf16.msra.mxu0 0
    %497 = vmatprep.subr.bf16.mxu0 0
    %498 = vmatpush2.bf16.msra.mxu0 0
    %499 = vmatprep.mubr.bf16.mxu0 0
    %500 = vmatmul.mubr.bf16.gmra.mxu0 %v465
    %v501 = vpop.f32.mrf.mxu0
    %v502 = vadd.f32 0.0, %v501
    %v503 = vpop.f32.mrf.mxu0
    %v504 = vpop.f32.mrf.mxu0
    %v505 = vadd.f32 0.0, %v504
    %v506 = vpop.f32.mrf.mxu0
    %507 = vdwg.mxu0
    %v512 = vunpack.c.l.b16 %v442
    %v513 = vunpack.c.l.b16 %v443
    %v514 = vunpack.c.l.b16 %v444
    %v515 = vunpack.c.l.b16 %v445
    %v516 = vpack.c.b16 %v513, %v512
    %v517 = vpack.c.b16 %v515, %v514
    %v521 = vsel %vm137, %v441, 0
    %523 = vmatprep.subr.bf16.mxu0 0
    %524 = vmatpush1.bf16.msra.mxu0 0
    %525 = vmatprep.subr.bf16.mxu0 0
    %526 = vmatpush1.bf16.msra.mxu0 0
    %527 = vmatprep.subr.bf16.mxu0 0
    %528 = vmatpush1.bf16.msra.mxu0 0
    %529 = vmatprep.subr.bf16.mxu0 0
    %530 = vmatpush1.bf16.msra.mxu0 0
    %531 = vmatprep.subr.bf16.mxu0 0
    %532 = vmatpush1.bf16.msra.mxu0 0
    %533 = vmatprep.subr.bf16.mxu0 0
    %534 = vmatpush1.bf16.msra.mxu0 0
    %535 = vmatprep.subr.bf16.mxu0 0
    %536 = vmatpush1.bf16.msra.mxu0 %v517
    %537 = vmatprep.subr.bf16.mxu0 0
    %538 = vmatpush1.bf16.msra.mxu0 %v516
    %539 = vmatprep.subr.bf16.mxu0 0
    %540 = vmatpush2.bf16.msra.mxu0 0
    %541 = vmatprep.subr.bf16.mxu0 0
    %542 = vmatpush2.bf16.msra.mxu0 0
    %543 = vmatprep.subr.bf16.mxu0 0
    %544 = vmatpush2.bf16.msra.mxu0 0
    %545 = vmatprep.subr.bf16.mxu0 0
    %546 = vmatpush2.bf16.msra.mxu0 0
    %547 = vmatprep.subr.bf16.mxu0 0
    %548 = vmatpush2.bf16.msra.mxu0 0
    %549 = vmatprep.subr.bf16.mxu0 0
    %550 = vmatpush2.bf16.msra.mxu0 0
    %551 = vmatprep.subr.bf16.mxu0 0
    %552 = vmatpush2.bf16.msra.mxu0 0
    %553 = vmatprep.subr.bf16.mxu0 0
    %554 = vmatpush2.bf16.msra.mxu0 0
    %555 = vmatprep.mubr.bf16.mxu0 0
    %556 = vmatmul.mubr.bf16.gmra.mxu0 %v521
    %v557 = vpop.f32.mrf.mxu0
    %v558 = vadd.f32 %v502, %v557
    %v559 = vpop.f32.mrf.mxu0
    %v560 = vpop.f32.mrf.mxu0
    %v561 = vadd.f32 %v505, %v560
    %v562 = vpop.f32.mrf.mxu0
    %563 = vdwg.mxu0
    %v564 = vrot.slane %v420, 2
    %v565 = vrot.slane %v421, 2
    %vm566 = vcmp.lt.s32.totalorder %v183, 6
    %v567 = vsel %vm566, %v564, %v565
    %v568 = vsel %vm566, %v565, %v564
    %v569 = vadd.s32 %v207, 2
    %v570 = vadd.s32 %v208, 2
    %vm571 = vcmp.ge.s32.totalorder %v569, 0
    %vm572 = vcmp.ge.s32.totalorder %v570, 0
    %vm573 = vcmp.lt.s32.totalorder %v569, 8
    %vm574 = vcmp.lt.s32.totalorder %v570, 8
    %vm575 = vmand %vm571, %vm573
    %vm576 = vmand %vm572, %vm574
    %v577 = vsel %vm575, 1, 0
    %v578 = vsel %vm576, 1, 0
    %vm579 = vcmp.eq.s32.totalorder %v577, 1
    %vm580 = vcmp.eq.s32.totalorder %v578, 1
    %v581 = vsel %vm579, %v567, 0.0
    %v582 = vsel %vm580, %v568, 0.0
    %v583 = vpack.c.bf16 %v582, %v581
    %s584 = scalar_lea.vmem [#allocation7], 32
    %v585 = vld [vmem:[%s584] sm:$0xf]
    %v586 = vld [vmem:[%s584 + $0x4] sm:$0xf]
    %v587 = vld [vmem:[%s584 + $0x8] sm:$0xf]
    %v588 = vld [vmem:[%s584 + $0xc] sm:$0xf]
    %v593 = vunpack.c.l.b16 %v585
    %v594 = vunpack.c.l.b16 %v586
    %v595 = vunpack.c.l.b16 %v587
    %v596 = vunpack.c.l.b16 %v588
    %v597 = vpack.c.b16 %v594, %v593
    %v598 = vpack.c.b16 %v596, %v595
    %v602 = vsel %vm137, %v583, 0
    %604 = vmatprep.subr.bf16.mxu0 0
    %605 = vmatpush1.bf16.msra.mxu0 0
    %606 = vmatprep.subr.bf16.mxu0 0
    %607 = vmatpush1.bf16.msra.mxu0 0
    %608 = vmatprep.subr.bf16.mxu0 0
    %609 = vmatpush1.bf16.msra.mxu0 0
    %610 = vmatprep.subr.bf16.mxu0 0
    %611 = vmatpush1.bf16.msra.mxu0 0
    %612 = vmatprep.subr.bf16.mxu0 0
    %613 = vmatpush1.bf16.msra.mxu0 0
    %614 = vmatprep.subr.bf16.mxu0 0
    %615 = vmatpush1.bf16.msra.mxu0 0
    %616 = vmatprep.subr.bf16.mxu0 0
    %617 = vmatpush1.bf16.msra.mxu0 %v598
    %618 = vmatprep.subr.bf16.mxu0 0
    %619 = vmatpush1.bf16.msra.mxu0 %v597
    %620 = vmatprep.subr.bf16.mxu0 0
    %621 = vmatpush2.bf16.msra.mxu0 0
    %622 = vmatprep.subr.bf16.mxu0 0
    %623 = vmatpush2.bf16.msra.mxu0 0
    %624 = vmatprep.subr.bf16.mxu0 0
    %625 = vmatpush2.bf16.msra.mxu0 0
    %626 = vmatprep.subr.bf16.mxu0 0
    %627 = vmatpush2.bf16.msra.mxu0 0
    %628 = vmatprep.subr.bf16.mxu0 0
    %629 = vmatpush2.bf16.msra.mxu0 0
    %630 = vmatprep.subr.bf16.mxu0 0
    %631 = vmatpush2.bf16.msra.mxu0 0
    %632 = vmatprep.subr.bf16.mxu0 0
    %633 = vmatpush2.bf16.msra.mxu0 0
    %634 = vmatprep.subr.bf16.mxu0 0
    %635 = vmatpush2.bf16.msra.mxu0 0
    %636 = vmatprep.mubr.bf16.mxu0 0
    %637 = vmatmul.mubr.bf16.gmra.mxu0 %v602
    %v638 = vpop.f32.mrf.mxu0
    %v639 = vadd.f32 0.0, %v638
    %v640 = vpop.f32.mrf.mxu0
    %v641 = vpop.f32.mrf.mxu0
    %v642 = vadd.f32 0.0, %v641
    %v643 = vpop.f32.mrf.mxu0
    %644 = vdwg.mxu0
    %v645 = vadd.f32 %v558, %v639
    %v646 = vadd.f32 %v561, %v642
    %v647 = vld [vmem:[%s5] sm:$0x1]
    %v649 = vlaneseq
    %v650 = vshrl.u32 %v649, 7
    %v651 = vsub.s32 0, %v650
    %v652 = vrot.slane %v647, %v651
    %v654 = vadd.f32 %v645, %v652
    %v655 = vadd.f32 %v646, %v652
    %v656 = vmax.f32 %v654, 0.0
    %v657 = vmax.f32 %v655, 0.0
    %v658 = vld [vmem:[%s6] sm:$0xff]
    %v659 = vld [vmem:[%s6 + $0x8] sm:$0xff]
    %v660 = vld [vmem:[%s6 + $0x10] sm:$0xff]
    %v661 = vld [vmem:[%s6 + $0x18] sm:$0xff]
    %v662 = vpack.c.bf16 %v657, %v656
    %v663 = vld [vmem:[%s7] sm:$0xff]
    %v664 = vld [vmem:[%s7 + $0x8] sm:$0xff]
    %v665 = vld [vmem:[%s7 + $0x10] sm:$0xff]
    %v666 = vld [vmem:[%s7 + $0x18] sm:$0xff]
    %v667 = vld [vmem:[%s7 + $0x20] sm:$0xff]
    %v668 = vld [vmem:[%s7 + $0x28] sm:$0xff]
    %v669 = vld [vmem:[%s7 + $0x30] sm:$0xff]
    %v670 = vld [vmem:[%s7 + $0x38] sm:$0xff]
    %v679 = vunpack.c.l.b16 %v663
    %v680 = vunpack.c.h.b16 %v663
    %v681 = vunpack.c.l.b16 %v664
    %v682 = vunpack.c.h.b16 %v664
    %v683 = vunpack.c.l.b16 %v665
    %v684 = vunpack.c.h.b16 %v665
    %v685 = vunpack.c.l.b16 %v666
    %v686 = vunpack.c.h.b16 %v666
    %v687 = vunpack.c.l.b16 %v667
    %v688 = vunpack.c.h.b16 %v667
    %v689 = vunpack.c.l.b16 %v668
    %v690 = vunpack.c.h.b16 %v668
    %v691 = vunpack.c.l.b16 %v669
    %v692 = vunpack.c.h.b16 %v669
    %v693 = vunpack.c.l.b16 %v670
    %v694 = vunpack.c.h.b16 %v670
    %v695 = vpack.c.b16 %v683, %v679
    %v696 = vpack.c.b16 %v684, %v680
    %v697 = vpack.c.b16 %v685, %v681
    %v698 = vpack.c.b16 %v686, %v682
    %v699 = vpack.c.b16 %v691, %v687
    %v700 = vpack.c.b16 %v692, %v688
    %v701 = vpack.c.b16 %v693, %v689
    %v702 = vpack.c.b16 %v694, %v690
    %v712 = vsel %vm137, %v662, 0
    %714 = vmatprep.subr.bf16.mxu0 0
    %715 = vmatpush1.bf16.msra.mxu0 0
    %716 = vmatprep.subr.bf16.mxu0 0
    %717 = vmatpush1.bf16.msra.mxu0 0
    %718 = vmatprep.subr.bf16.mxu0 0
    %719 = vmatpush1.bf16.msra.mxu0 0
    %720 = vmatprep.subr.bf16.mxu0 0
    %721 = vmatpush1.bf16.msra.mxu0 0
    %722 = vmatprep.subr.bf16.mxu0 0
    %723 = vmatpush1.bf16.msra.mxu0 0
    %724 = vmatprep.subr.bf16.mxu0 0
    %725 = vmatpush1.bf16.msra.mxu0 0
    %726 = vmatprep.subr.bf16.mxu0 %v700
    %727 = vmatpush1.bf16.msra.mxu0 %v699
    %728 = vmatprep.subr.bf16.mxu0 %v696
    %729 = vmatpush1.bf16.msra.mxu0 %v695
    %730 = vmatprep.subr.bf16.mxu0 0
    %731 = vmatpush2.bf16.msra.mxu0 0
    %732 = vmatprep.subr.bf16.mxu0 0
    %733 = vmatpush2.bf16.msra.mxu0 0
    %734 = vmatprep.subr.bf16.mxu0 0
    %735 = vmatpush2.bf16.msra.mxu0 0
    %736 = vmatprep.subr.bf16.mxu0 0
    %737 = vmatpush2.bf16.msra.mxu0 0
    %738 = vmatprep.subr.bf16.mxu0 0
    %739 = vmatpush2.bf16.msra.mxu0 0
    %740 = vmatprep.subr.bf16.mxu0 0
    %741 = vmatpush2.bf16.msra.mxu0 0
    %742 = vmatprep.subr.bf16.mxu0 0
    %743 = vmatpush2.bf16.msra.mxu0 0
    %744 = vmatprep.subr.bf16.mxu0 0
    %745 = vmatpush2.bf16.msra.mxu0 0
    %746 = vmatprep.mubr.bf16.mxu0 0
    %747 = vmatmul.mubr.bf16.gmra.mxu0 %v712
    %v748 = vpop.f32.mrf.mxu0
    %v749 = vadd.f32 0.0, %v748
    %v750 = vpop.f32.mrf.mxu0
    %v751 = vadd.f32 0.0, %v750
    %v752 = vpop.f32.mrf.mxu0
    %v753 = vadd.f32 0.0, %v752
    %v754 = vpop.f32.mrf.mxu0
    %v755 = vadd.f32 0.0, %v754
    %756 = vdwg.mxu0
    %757 = vmatprep.subr.bf16.mxu0 0
    %758 = vmatpush1.bf16.msra.mxu0 0
    %759 = vmatprep.subr.bf16.mxu0 0
    %760 = vmatpush1.bf16.msra.mxu0 0
    %761 = vmatprep.subr.bf16.mxu0 0
    %762 = vmatpush1.bf16.msra.mxu0 0
    %763 = vmatprep.subr.bf16.mxu0 0
    %764 = vmatpush1.bf16.msra.mxu0 0
    %765 = vmatprep.subr.bf16.mxu0 0
    %766 = vmatpush1.bf16.msra.mxu0 0
    %767 = vmatprep.subr.bf16.mxu0 0
    %768 = vmatpush1.bf16.msra.mxu0 0
    %769 = vmatprep.subr.bf16.mxu0 %v702
    %770 = vmatpush1.bf16.msra.mxu0 %v701
    %771 = vmatprep.subr.bf16.mxu0 %v698
    %772 = vmatpush1.bf16.msra.mxu0 %v697
    %773 = vmatprep.subr.bf16.mxu0 0
    %774 = vmatpush2.bf16.msra.mxu0 0
    %775 = vmatprep.subr.bf16.mxu0 0
    %776 = vmatpush2.bf16.msra.mxu0 0
    %777 = vmatprep.subr.bf16.mxu0 0
    %778 = vmatpush2.bf16.msra.mxu0 0
    %779 = vmatprep.subr.bf16.mxu0 0
    %780 = vmatpush2.bf16.msra.mxu0 0
    %781 = vmatprep.subr.bf16.mxu0 0
    %782 = vmatpush2.bf16.msra.mxu0 0
    %783 = vmatprep.subr.bf16.mxu0 0
    %784 = vmatpush2.bf16.msra.mxu0 0
    %785 = vmatprep.subr.bf16.mxu0 0
    %786 = vmatpush2.bf16.msra.mxu0 0
    %787 = vmatprep.subr.bf16.mxu0 0
    %788 = vmatpush2.bf16.msra.mxu0 0
    %789 = vmatprep.mubr.bf16.mxu0 0
    %790 = vmatmul.mubr.bf16.gmra.mxu0 %v712
    %v791 = vpop.f32.mrf.mxu0
    %v792 = vadd.f32 0.0, %v791
    %v793 = vpop.f32.mrf.mxu0
    %v794 = vadd.f32 0.0, %v793
    %v795 = vpop.f32.mrf.mxu0
    %v796 = vadd.f32 0.0, %v795
    %v797 = vpop.f32.mrf.mxu0
    %v798 = vadd.f32 0.0, %v797
    %799 = vdwg.mxu0
    %v804 = vunpack.c.l.b16 %v658
    %v805 = vunpack.c.h.b16 %v658
    %v806 = vunpack.c.l.b16 %v659
    %v807 = vunpack.c.h.b16 %v659
    %v808 = vunpack.c.l.b16 %v660
    %v809 = vunpack.c.h.b16 %v660
    %v810 = vunpack.c.l.b16 %v661
    %v811 = vunpack.c.h.b16 %v661
    %v812 = vpack.c.b16 %v808, %v804
    %v813 = vpack.c.b16 %v809, %v805
    %v814 = vpack.c.b16 %v810, %v806
    %v815 = vpack.c.b16 %v811, %v807
    %820 = vmatprep.subr.bf16.mxu0 0
    %821 = vmatpush1.bf16.msra.mxu0 0
    %822 = vmatprep.subr.bf16.mxu0 0
    %823 = vmatpush1.bf16.msra.mxu0 0
    %824 = vmatprep.subr.bf16.mxu0 0
    %825 = vmatpush1.bf16.msra.mxu0 0
    %826 = vmatprep.subr.bf16.mxu0 0
    %827 = vmatpush1.bf16.msra.mxu0 0
    %828 = vmatprep.subr.bf16.mxu0 0
    %829 = vmatpush1.bf16.msra.mxu0 0
    %830 = vmatprep.subr.bf16.mxu0 0
    %831 = vmatpush1.bf16.msra.mxu0 0
    %832 = vmatprep.subr.bf16.mxu0 0
    %833 = vmatpush1.bf16.msra.mxu0 0
    %834 = vmatprep.subr.bf16.mxu0 %v813
    %835 = vmatpush1.bf16.msra.mxu0 %v812
    %836 = vmatprep.subr.bf16.mxu0 0
    %837 = vmatpush2.bf16.msra.mxu0 0
    %838 = vmatprep.subr.bf16.mxu0 0
    %839 = vmatpush2.bf16.msra.mxu0 0
    %840 = vmatprep.subr.bf16.mxu0 0
    %841 = vmatpush2.bf16.msra.mxu0 0
    %842 = vmatprep.subr.bf16.mxu0 0
    %843 = vmatpush2.bf16.msra.mxu0 0
    %844 = vmatprep.subr.bf16.mxu0 0
    %845 = vmatpush2.bf16.msra.mxu0 0
    %846 = vmatprep.subr.bf16.mxu0 0
    %847 = vmatpush2.bf16.msra.mxu0 0
    %848 = vmatprep.subr.bf16.mxu0 0
    %849 = vmatpush2.bf16.msra.mxu0 0
    %850 = vmatprep.subr.bf16.mxu0 0
    %851 = vmatpush2.bf16.msra.mxu0 0
    %852 = vmatprep.mubr.bf16.mxu0 0
    %853 = vmatmul.mubr.bf16.gmra.mxu0 %v243
    %v854 = vpop.f32.mrf.mxu0
    %v855 = vadd.f32 %v749, %v854
    %v856 = vpop.f32.mrf.mxu0
    %v857 = vadd.f32 %v751, %v856
    %v858 = vpop.f32.mrf.mxu0
    %v859 = vadd.f32 %v753, %v858
    %v860 = vpop.f32.mrf.mxu0
    %v861 = vadd.f32 %v755, %v860
    %862 = vdwg.mxu0
    %863 = vmatprep.subr.bf16.mxu0 0
    %864 = vmatpush1.bf16.msra.mxu0 0
    %865 = vmatprep.subr.bf16.mxu0 0
    %866 = vmatpush1.bf16.msra.mxu0 0
    %867 = vmatprep.subr.bf16.mxu0 0
    %868 = vmatpush1.bf16.msra.mxu0 0
    %869 = vmatprep.subr.bf16.mxu0 0
    %870 = vmatpush1.bf16.msra.mxu0 0
    %871 = vmatprep.subr.bf16.mxu0 0
    %872 = vmatpush1.bf16.msra.mxu0 0
    %873 = vmatprep.subr.bf16.mxu0 0
    %874 = vmatpush1.bf16.msra.mxu0 0
    %875 = vmatprep.subr.bf16.mxu0 0
    %876 = vmatpush1.bf16.msra.mxu0 0
    %877 = vmatprep.subr.bf16.mxu0 %v815
    %878 = vmatpush1.bf16.msra.mxu0 %v814
    %879 = vmatprep.subr.bf16.mxu0 0
    %880 = vmatpush2.bf16.msra.mxu0 0
    %881 = vmatprep.subr.bf16.mxu0 0
    %882 = vmatpush2.bf16.msra.mxu0 0
    %883 = vmatprep.subr.bf16.mxu0 0
    %884 = vmatpush2.bf16.msra.mxu0 0
    %885 = vmatprep.subr.bf16.mxu0 0
    %886 = vmatpush2.bf16.msra.mxu0 0
    %887 = vmatprep.subr.bf16.mxu0 0
    %888 = vmatpush2.bf16.msra.mxu0 0
    %889 = vmatprep.subr.bf16.mxu0 0
    %890 = vmatpush2.bf16.msra.mxu0 0
    %891 = vmatprep.subr.bf16.mxu0 0
    %892 = vmatpush2.bf16.msra.mxu0 0
    %893 = vmatprep.subr.bf16.mxu0 0
    %894 = vmatpush2.bf16.msra.mxu0 0
    %895 = vmatprep.mubr.bf16.mxu0 0
    %896 = vmatmul.mubr.bf16.gmra.mxu0 %v243
    %v897 = vpop.f32.mrf.mxu0
    %v898 = vadd.f32 %v792, %v897
    %v899 = vpop.f32.mrf.mxu0
    %v900 = vadd.f32 %v794, %v899
    %v901 = vpop.f32.mrf.mxu0
    %v902 = vadd.f32 %v796, %v901
    %v903 = vpop.f32.mrf.mxu0
    %v904 = vadd.f32 %v798, %v903
    %905 = vdwg.mxu0
    %v906 = vld [vmem:[%s9] sm:$0xf]
    %v908 = vlaneseq
    %v909 = vshrl.u32 %v908, 7
    %v910 = vsub.s32 0, %v909
    %v911 = vrot.slane %v906, %v910
    %v912 = vlaneseq
    %v913 = vshrl.u32 %v912, 7
    %v914 = vsub.s32 1, %v913
    %v915 = vrot.slane %v906, %v914
    %v916 = vlaneseq
    %v917 = vshrl.u32 %v916, 7
    %v918 = vsub.s32 2, %v917
    %v919 = vrot.slane %v906, %v918
    %v920 = vlaneseq
    %v921 = vshrl.u32 %v920, 7
    %v922 = vsub.s32 3, %v921
    %v923 = vrot.slane %v906, %v922
    %v928 = vadd.f32 %v855, %v911
    %v929 = vadd.f32 %v857, %v915
    %v930 = vadd.f32 %v898, %v919
    %v931 = vadd.f32 %v900, %v923
    %v932 = vadd.f32 %v859, %v911
    %v933 = vadd.f32 %v861, %v915
    %v934 = vadd.f32 %v902, %v919
    %v935 = vadd.f32 %v904, %v923
    %v936 = vld [vmem:[#allocation8] sm:$0xff]
    %v937 = vld [vmem:[#allocation8 + $0x8] sm:$0xff]
    %v938 = vld [vmem:[#allocation8 + $0x10] sm:$0xff]
    %v939 = vld [vmem:[#allocation8 + $0x18] sm:$0xff]
    %v940 = vld [vmem:[#allocation8 + $0x20] sm:$0xff]
    %v941 = vld [vmem:[#allocation8 + $0x28] sm:$0xff]
    %v942 = vld [vmem:[#allocation8 + $0x30] sm:$0xff]
    %v943 = vld [vmem:[#allocation8 + $0x38] sm:$0xff]
    %v944 = vld [vmem:[#allocation8 + $0x40] sm:$0xff]
    %v945 = vld [vmem:[#allocation8 + $0x48] sm:$0xff]
    %v946 = vld [vmem:[#allocation8 + $0x50] sm:$0xff]
    %v947 = vld [vmem:[#allocation8 + $0x58] sm:$0xff]
    %v948 = vld [vmem:[#allocation8 + $0x60] sm:$0xff]
    %v949 = vld [vmem:[#allocation8 + $0x68] sm:$0xff]
    %v950 = vld [vmem:[#allocation8 + $0x70] sm:$0xff]
    %v951 = vld [vmem:[#allocation8 + $0x78] sm:$0xff]
    %v952 = vld [vmem:[#allocation8 + $0x80] sm:$0xff]
    %v953 = vld [vmem:[#allocation8 + $0x88] sm:$0xff]
    %v954 = vld [vmem:[#allocation8 + $0x90] sm:$0xff]
    %v955 = vld [vmem:[#allocation8 + $0x98] sm:$0xff]
    %v956 = vld [vmem:[#allocation8 + $0xa0] sm:$0xff]
    %v957 = vld [vmem:[#allocation8 + $0xa8] sm:$0xff]
    %v958 = vld [vmem:[#allocation8 + $0xb0] sm:$0xff]
    %v959 = vld [vmem:[#allocation8 + $0xb8] sm:$0xff]
    %v960 = vld [vmem:[#allocation8 + $0xc0] sm:$0xff]
    %v961 = vld [vmem:[#allocation8 + $0xc8] sm:$0xff]
    %v962 = vld [vmem:[#allocation8 + $0xd0] sm:$0xff]
    %v963 = vld [vmem:[#allocation8 + $0xd8] sm:$0xff]
    %v964 = vld [vmem:[#allocation8 + $0xe0] sm:$0xff]
    %v965 = vld [vmem:[#allocation8 + $0xe8] sm:$0xff]
    %v966 = vld [vmem:[#allocation8 + $0xf0] sm:$0xff]
    %v967 = vld [vmem:[#allocation8 + $0xf8] sm:$0xff]
    %v968 = vld [vmem:[%s12] sm:$0xff]
    %v969 = vld [vmem:[%s13] sm:$0xff]
    %v970 = vpack.c.bf16 %v968, %v968
    %v1003 = vunpack.c.l.b16 %v936
    %v1004 = vunpack.c.h.b16 %v936
    %v1005 = vunpack.c.l.b16 %v937
    %v1006 = vunpack.c.h.b16 %v937
    %v1007 = vunpack.c.l.b16 %v938
    %v1008 = vunpack.c.h.b16 %v938
    %v1009 = vunpack.c.l.b16 %v939
    %v1010 = vunpack.c.h.b16 %v939
    %v1011 = vunpack.c.l.b16 %v940
    %v1012 = vunpack.c.h.b16 %v940
    %v1013 = vunpack.c.l.b16 %v941
    %v1014 = vunpack.c.h.b16 %v941
    %v1015 = vunpack.c.l.b16 %v942
    %v1016 = vunpack.c.h.b16 %v942
    %v1017 = vunpack.c.l.b16 %v943
    %v1018 = vunpack.c.h.b16 %v943
    %v1019 = vunpack.c.l.b16 %v944
    %v1020 = vunpack.c.h.b16 %v944
    %v1021 = vunpack.c.l.b16 %v945
    %v1022 = vunpack.c.h.b16 %v945
    %v1023 = vunpack.c.l.b16 %v946
    %v1024 = vunpack.c.h.b16 %v946
    %v1025 = vunpack.c.l.b16 %v947
    %v1026 = vunpack.c.h.b16 %v947
    %v1027 = vunpack.c.l.b16 %v948
    %v1028 = vunpack.c.h.b16 %v948
    %v1029 = vunpack.c.l.b16 %v949
    %v1030 = vunpack.c.h.b16 %v949
    %v1031 = vunpack.c.l.b16 %v950
    %v1032 = vunpack.c.h.b16 %v950
    %v1033 = vunpack.c.l.b16 %v951
    %v1034 = vunpack.c.h.b16 %v951
    %v1035 = vunpack.c.l.b16 %v952
    %v1036 = vunpack.c.h.b16 %v952
    %v1037 = vunpack.c.l.b16 %v953
    %v1038 = vunpack.c.h.b16 %v953
    %v1039 = vunpack.c.l.b16 %v954
    %v1040 = vunpack.c.h.b16 %v954
    %v1041 = vunpack.c.l.b16 %v955
    %v1042 = vunpack.c.h.b16 %v955
    %v1043 = vunpack.c.l.b16 %v956
    %v1044 = vunpack.c.h.b16 %v956
    %v1045 = vunpack.c.l.b16 %v957
    %v1046 = vunpack.c.h.b16 %v957
    %v1047 = vunpack.c.l.b16 %v958
    %v1048 = vunpack.c.h.b16 %v958
    %v1049 = vunpack.c.l.b16 %v959
    %v1050 = vunpack.c.h.b16 %v959
    %v1051 = vunpack.c.l.b16 %v960
    %v1052 = vunpack.c.h.b16 %v960
    %v1053 = vunpack.c.l.b16 %v961
    %v1054 = vunpack.c.h.b16 %v961
    %v1055 = vunpack.c.l.b16 %v962
    %v1056 = vunpack.c.h.b16 %v962
    %v1057 = vunpack.c.l.b16 %v963
    %v1058 = vunpack.c.h.b16 %v963
    %v1059 = vunpack.c.l.b16 %v964
    %v1060 = vunpack.c.h.b16 %v964
    %v1061 = vunpack.c.l.b16 %v965
    %v1062 = vunpack.c.h.b16 %v965
    %v1063 = vunpack.c.l.b16 %v966
    %v1064 = vunpack.c.h.b16 %v966
    %v1065 = vunpack.c.l.b16 %v967
    %v1066 = vunpack.c.h.b16 %v967
    %v1067 = vpack.c.b16 %v1007, %v1003
    %v1068 = vpack.c.b16 %v1008, %v1004
    %v1069 = vpack.c.b16 %v1009, %v1005
    %v1070 = vpack.c.b16 %v1010, %v1006
    %v1071 = vpack.c.b16 %v1015, %v1011
    %v1072 = vpack.c.b16 %v1016, %v1012
    %v1073 = vpack.c.b16 %v1017, %v1013
    %v1074 = vpack.c.b16 %v1018, %v1014
    %v1075 = vpack.c.b16 %v1023, %v1019
    %v1076 = vpack.c.b16 %v1024, %v1020
    %v1077 = vpack.c.b16 %v1025, %v1021
    %v1078 = vpack.c.b16 %v1026, %v1022
    %v1079 = vpack.c.b16 %v1031, %v1027
    %v1080 = vpack.c.b16 %v1032, %v1028
    %v1081 = vpack.c.b16 %v1033, %v1029
    %v1082 = vpack.c.b16 %v1034, %v1030
    %v1083 = vpack.c.b16 %v1039, %v1035
    %v1084 = vpack.c.b16 %v1040, %v1036
    %v1085 = vpack.c.b16 %v1041, %v1037
    %v1086 = vpack.c.b16 %v1042, %v1038
    %v1087 = vpack.c.b16 %v1047, %v1043
    %v1088 = vpack.c.b16 %v1048, %v1044
    %v1089 = vpack.c.b16 %v1049, %v1045
    %v1090 = vpack.c.b16 %v1050, %v1046
    %v1091 = vpack.c.b16 %v1055, %v1051
    %v1092 = vpack.c.b16 %v1056, %v1052
    %v1093 = vpack.c.b16 %v1057, %v1053
    %v1094 = vpack.c.b16 %v1058, %v1054
    %v1095 = vpack.c.b16 %v1063, %v1059
    %v1096 = vpack.c.b16 %v1064, %v1060
    %v1097 = vpack.c.b16 %v1065, %v1061
    %v1098 = vpack.c.b16 %v1066, %v1062
    %1131 = vmatprep.subr.bf16.mxu0 %v1096
    %1132 = vmatpush1.bf16.msra.mxu0 %v1095
    %1133 = vmatprep.subr.bf16.mxu0 %v1092
    %1134 = vmatpush1.bf16.msra.mxu0 %v1091
    %1135 = vmatprep.subr.bf16.mxu0 %v1088
    %1136 = vmatpush1.bf16.msra.mxu0 %v1087
    %1137 = vmatprep.subr.bf16.mxu0 %v1084
    %1138 = vmatpush1.bf16.msra.mxu0 %v1083
    %1139 = vmatprep.subr.bf16.mxu0 %v1080
    %1140 = vmatpush1.bf16.msra.mxu0 %v1079
    %1141 = vmatprep.subr.bf16.mxu0 %v1076
    %1142 = vmatpush1.bf16.msra.mxu0 %v1075
    %1143 = vmatprep.subr.bf16.mxu0 %v1072
    %1144 = vmatpush1.bf16.msra.mxu0 %v1071
    %1145 = vmatprep.subr.bf16.mxu0 %v1068
    %1146 = vmatpush1.bf16.msra.mxu0 %v1067
    %1147 = vmatprep.subr.bf16.mxu0 0
    %1148 = vmatpush2.bf16.msra.mxu0 0
    %1149 = vmatprep.subr.bf16.mxu0 0
    %1150 = vmatpush2.bf16.msra.mxu0 0
    %1151 = vmatprep.subr.bf16.mxu0 0
    %1152 = vmatpush2.bf16.msra.mxu0 0
    %1153 = vmatprep.subr.bf16.mxu0 0
    %1154 = vmatpush2.bf16.msra.mxu0 0
    %1155 = vmatprep.subr.bf16.mxu0 0
    %1156 = vmatpush2.bf16.msra.mxu0 0
    %1157 = vmatprep.subr.bf16.mxu0 0
    %1158 = vmatpush2.bf16.msra.mxu0 0
    %1159 = vmatprep.subr.bf16.mxu0 0
    %1160 = vmatpush2.bf16.msra.mxu0 0
    %1161 = vmatprep.subr.bf16.mxu0 0
    %1162 = vmatpush2.bf16.msra.mxu0 0
    %1163 = vmatprep.mubr.bf16.mxu0 0
    %1164 = vmatmul.mubr.bf16.gmra.mxu0 %v970
    %v1165 = vpop.f32.mrf.mxu0
    %v1166 = vadd.f32 0.0, %v1165
    %v1167 = vpop.f32.mrf.mxu0
    %v1168 = vadd.f32 0.0, %v1167
    %v1169 = vpop.f32.mrf.mxu0
    %v1170 = vpop.f32.mrf.mxu0
    %1171 = vdwg.mxu0
    %1172 = vmatprep.subr.bf16.mxu0 %v1098
    %1173 = vmatpush1.bf16.msra.mxu0 %v1097
    %1174 = vmatprep.subr.bf16.mxu0 %v1094
    %1175 = vmatpush1.bf16.msra.mxu0 %v1093
    %1176 = vmatprep.subr.bf16.mxu0 %v1090
    %1177 = vmatpush1.bf16.msra.mxu0 %v1089
    %1178 = vmatprep.subr.bf16.mxu0 %v1086
    %1179 = vmatpush1.bf16.msra.mxu0 %v1085
    %1180 = vmatprep.subr.bf16.mxu0 %v1082
    %1181 = vmatpush1.bf16.msra.mxu0 %v1081
    %1182 = vmatprep.subr.bf16.mxu0 %v1078
    %1183 = vmatpush1.bf16.msra.mxu0 %v1077
    %1184 = vmatprep.subr.bf16.mxu0 %v1074
    %1185 = vmatpush1.bf16.msra.mxu0 %v1073
    %1186 = vmatprep.subr.bf16.mxu0 %v1070
    %1187 = vmatpush1.bf16.msra.mxu0 %v1069
    %1188 = vmatprep.subr.bf16.mxu0 0
    %1189 = vmatpush2.bf16.msra.mxu0 0
    %1190 = vmatprep.subr.bf16.mxu0 0
    %1191 = vmatpush2.bf16.msra.mxu0 0
    %1192 = vmatprep.subr.bf16.mxu0 0
    %1193 = vmatpush2.bf16.msra.mxu0 0
    %1194 = vmatprep.subr.bf16.mxu0 0
    %1195 = vmatpush2.bf16.msra.mxu0 0
    %1196 = vmatprep.subr.bf16.mxu0 0
    %1197 = vmatpush2.bf16.msra.mxu0 0
    %1198 = vmatprep.subr.bf16.mxu0 0
    %1199 = vmatpush2.bf16.msra.mxu0 0
    %1200 = vmatprep.subr.bf16.mxu0 0
    %1201 = vmatpush2.bf16.msra.mxu0 0
    %1202 = vmatprep.subr.bf16.mxu0 0
    %1203 = vmatpush2.bf16.msra.mxu0 0
    %1204 = vmatprep.mubr.bf16.mxu0 0
    %1205 = vmatmul.mubr.bf16.gmra.mxu0 %v970
    %v1206 = vpop.f32.mrf.mxu0
    %v1207 = vadd.f32 0.0, %v1206
    %v1208 = vpop.f32.mrf.mxu0
    %v1209 = vadd.f32 0.0, %v1208
    %v1210 = vpop.f32.mrf.mxu0
    %v1211 = vpop.f32.mrf.mxu0
    %1212 = vdwg.mxu0
    %v1213 = vadd.f32 %v928, %v1166
    %v1214 = vadd.f32 %v929, %v1168
    %v1215 = vadd.f32 %v930, %v1207
    %v1216 = vadd.f32 %v931, %v1209
    %v1217 = vxor.u32 %v1213, 2147483648
    %v1218 = vxor.u32 %v1214, 2147483648
    %v1219 = vxor.u32 %v1215, 2147483648
    %v1220 = vmul.f32 %v1217, 1.442695
    %v1221 = vpow.pop %v1220
    %v1222 = vmul.f32 %v1218, 1.442695
    %v1223 = vpow.pop %v1222
    %v1224 = vmul.f32 %v1219, 1.442695
    %v1225 = vpow.pop %v1224
    %v1226 = vadd.f32 %v1221, 1.0
    %v1227 = vadd.f32 %v1223, 1.0
    %v1228 = vadd.f32 %v1225, 1.0
    %v1229 = vrcp.pop %v1226
    %v1230 = vmul.f32 1.0, %v1229
    %v1231 = vrcp.pop %v1227
    %v1232 = vmul.f32 1.0, %v1231
    %v1233 = vrcp.pop %v1228
    %v1234 = vmul.f32 1.0, %v1233
    %v1235 = vtanh.pop %v1216
    %v1236 = vmul.f32 %v1232, %v969
    %v1237 = vmul.f32 %v1230, %v1235
    %v1238 = vadd.f32 %v1236, %v1237
    %v1239 = vtanh.pop %v1238
    %v1240 = vmul.f32 %v1234, %v1239
    %v1241 = vpack.c.bf16 %v1240, %v1240
    %1242 = vmatprep.subr.bf16.mxu0 %v1096
    %1243 = vmatpush1.bf16.msra.mxu0 %v1095
    %1244 = vmatprep.subr.bf16.mxu0 %v1092
    %1245 = vmatpush1.bf16.msra.mxu0 %v1091
    %1246 = vmatprep.subr.bf16.mxu0 %v1088
    %1247 = vmatpush1.bf16.msra.mxu0 %v1087
    %1248 = vmatprep.subr.bf16.mxu0 %v1084
    %1249 = vmatpush1.bf16.msra.mxu0 %v1083
    %1250 = vmatprep.subr.bf16.mxu0 %v1080
    %1251 = vmatpush1.bf16.msra.mxu0 %v1079
    %1252 = vmatprep.subr.bf16.mxu0 %v1076
    %1253 = vmatpush1.bf16.msra.mxu0 %v1075
    %1254 = vmatprep.subr.bf16.mxu0 %v1072
    %1255 = vmatpush1.bf16.msra.mxu0 %v1071
    %1256 = vmatprep.subr.bf16.mxu0 %v1068
    %1257 = vmatpush1.bf16.msra.mxu0 %v1067
    %1258 = vmatprep.subr.bf16.mxu0 0
    %1259 = vmatpush2.bf16.msra.mxu0 0
    %1260 = vmatprep.subr.bf16.mxu0 0
    %1261 = vmatpush2.bf16.msra.mxu0 0
    %1262 = vmatprep.subr.bf16.mxu0 0
    %1263 = vmatpush2.bf16.msra.mxu0 0
    %1264 = vmatprep.subr.bf16.mxu0 0
    %1265 = vmatpush2.bf16.msra.mxu0 0
    %1266 = vmatprep.subr.bf16.mxu0 0
    %1267 = vmatpush2.bf16.msra.mxu0 0
    %1268 = vmatprep.subr.bf16.mxu0 0
    %1269 = vmatpush2.bf16.msra.mxu0 0
    %1270 = vmatprep.subr.bf16.mxu0 0
    %1271 = vmatpush2.bf16.msra.mxu0 0
    %1272 = vmatprep.subr.bf16.mxu0 0
    %1273 = vmatpush2.bf16.msra.mxu0 0
    %1274 = vmatprep.mubr.bf16.mxu0 0
    %1275 = vmatmul.mubr.bf16.gmra.mxu0 %v1241
    %v1276 = vpop.f32.mrf.mxu0
    %v1277 = vadd.f32 0.0, %v1276
    %v1278 = vpop.f32.mrf.mxu0
    %v1279 = vadd.f32 0.0, %v1278
    %v1280 = vpop.f32.mrf.mxu0
    %v1281 = vpop.f32.mrf.mxu0
    %1282 = vdwg.mxu0
    %1283 = vmatprep.subr.bf16.mxu0 %v1098
    %1284 = vmatpush1.bf16.msra.mxu0 %v1097
    %1285 = vmatprep.subr.bf16.mxu0 %v1094
    %1286 = vmatpush1.bf16.msra.mxu0 %v1093
    %1287 = vmatprep.subr.bf16.mxu0 %v1090
    %1288 = vmatpush1.bf16.msra.mxu0 %v1089
    %1289 = vmatprep.subr.bf16.mxu0 %v1086
    %1290 = vmatpush1.bf16.msra.mxu0 %v1085
    %1291 = vmatprep.subr.bf16.mxu0 %v1082
    %1292 = vmatpush1.bf16.msra.mxu0 %v1081
    %1293 = vmatprep.subr.bf16.mxu0 %v1078
    %1294 = vmatpush1.bf16.msra.mxu0 %v1077
    %1295 = vmatprep.subr.bf16.mxu0 %v1074
    %1296 = vmatpush1.bf16.msra.mxu0 %v1073
    %1297 = vmatprep.subr.bf16.mxu0 %v1070
    %1298 = vmatpush1.bf16.msra.mxu0 %v1069
    %1299 = vmatprep.subr.bf16.mxu0 0
    %1300 = vmatpush2.bf16.msra.mxu0 0
    %1301 = vmatprep.subr.bf16.mxu0 0
    %1302 = vmatpush2.bf16.msra.mxu0 0
    %1303 = vmatprep.subr.bf16.mxu0 0
    %1304 = vmatpush2.bf16.msra.mxu0 0
    %1305 = vmatprep.subr.bf16.mxu0 0
    %1306 = vmatpush2.bf16.msra.mxu0 0
    %1307 = vmatprep.subr.bf16.mxu0 0
    %1308 = vmatpush2.bf16.msra.mxu0 0
    %1309 = vmatprep.subr.bf16.mxu0 0
    %1310 = vmatpush2.bf16.msra.mxu0 0
    %1311 = vmatprep.subr.bf16.mxu0 0
    %1312 = vmatpush2.bf16.msra.mxu0 0
    %1313 = vmatprep.subr.bf16.mxu0 0
    %1314 = vmatpush2.bf16.msra.mxu0 0
    %1315 = vmatprep.mubr.bf16.mxu0 0
    %1316 = vmatmul.mubr.bf16.gmra.mxu0 %v1241
    %v1317 = vpop.f32.mrf.mxu0
    %v1318 = vadd.f32 0.0, %v1317
    %v1319 = vpop.f32.mrf.mxu0
    %v1320 = vadd.f32 0.0, %v1319
    %v1321 = vpop.f32.mrf.mxu0
    %v1322 = vpop.f32.mrf.mxu0
    %1323 = vdwg.mxu0
    %v1324 = vadd.f32 %v932, %v1277
    %v1325 = vadd.f32 %v933, %v1279
    %v1326 = vadd.f32 %v934, %v1318
    %v1327 = vadd.f32 %v935, %v1320
    %v1328 = vxor.u32 %v1324, 2147483648
    %v1329 = vxor.u32 %v1325, 2147483648
    %v1330 = vxor.u32 %v1326, 2147483648
    %v1331 = vmul.f32 %v1328, 1.442695
    %v1332 = vpow.pop %v1331
    %v1333 = vmul.f32 %v1329, 1.442695
    %v1334 = vpow.pop %v1333
    %v1335 = vmul.f32 %v1330, 1.442695
    %v1336 = vpow.pop %v1335
    %v1337 = vadd.f32 %v1332, 1.0
    %v1338 = vadd.f32 %v1334, 1.0
    %v1339 = vadd.f32 %v1336, 1.0
    %v1340 = vrcp.pop %v1337
    %v1341 = vmul.f32 1.0, %v1340
    %v1342 = vrcp.pop %v1338
    %v1343 = vmul.f32 1.0, %v1342
    %v1344 = vrcp.pop %v1339
    %v1345 = vmul.f32 1.0, %v1344
    %v1346 = vtanh.pop %v1327
    %v1347 = vmul.f32 %v1343, %v1238
    %v1348 = vmul.f32 %v1341, %v1346
    %v1349 = vadd.f32 %v1347, %v1348
    %v1350 = vtanh.pop %v1349
    %v1351 = vmul.f32 %v1345, %v1350
    %v1352 = vpack.c.bf16 %v1351, %v1240
    %v1353 = vld [vmem:[%s10] sm:$0xf]
    %v1354 = vld [vmem:[%s10 + $0x4] sm:$0xf]
    %v1355 = vld [vmem:[%s10 + $0x8] sm:$0xf]
    %v1356 = vld [vmem:[%s10 + $0xc] sm:$0xf]
    %v1357 = vld [vmem:[%s10 + $0x10] sm:$0xf]
    %v1358 = vld [vmem:[%s10 + $0x14] sm:$0xf]
    %v1359 = vld [vmem:[%s10 + $0x18] sm:$0xf]
    %v1360 = vld [vmem:[%s10 + $0x1c] sm:$0xf]
    %v1361 = vld [vmem:[%s10 + $0x20] sm:$0xf]
    %v1362 = vld [vmem:[%s10 + $0x24] sm:$0xf]
    %v1363 = vld [vmem:[%s10 + $0x28] sm:$0xf]
    %v1364 = vld [vmem:[%s10 + $0x2c] sm:$0xf]
    %v1365 = vld [vmem:[%s10 + $0x30] sm:$0xf]
    %v1366 = vld [vmem:[%s10 + $0x34] sm:$0xf]
    %v1367 = vld [vmem:[%s10 + $0x38] sm:$0xf]
    %v1368 = vld [vmem:[%s10 + $0x3c] sm:$0xf]
    %v1369 = vld [vmem:[%s11] sm:$0x1]
    %v1371 = vlaneseq
    %v1372 = vshrl.u32 %v1371, 7
    %v1373 = vsub.s32 0, %v1372
    %v1374 = vrot.slane %v1369, %v1373
    %v1392 = vunpack.c.l.b16 %v1353
    %v1393 = vunpack.c.l.b16 %v1354
    %v1394 = vunpack.c.l.b16 %v1355
    %v1395 = vunpack.c.l.b16 %v1356
    %v1396 = vunpack.c.l.b16 %v1357
    %v1397 = vunpack.c.l.b16 %v1358
    %v1398 = vunpack.c.l.b16 %v1359
    %v1399 = vunpack.c.l.b16 %v1360
    %v1400 = vunpack.c.l.b16 %v1361
    %v1401 = vunpack.c.l.b16 %v1362
    %v1402 = vunpack.c.l.b16 %v1363
    %v1403 = vunpack.c.l.b16 %v1364
    %v1404 = vunpack.c.l.b16 %v1365
    %v1405 = vunpack.c.l.b16 %v1366
    %v1406 = vunpack.c.l.b16 %v1367
    %v1407 = vunpack.c.l.b16 %v1368
    %v1408 = vpack.c.b16 %v1393, %v1392
    %v1409 = vpack.c.b16 %v1395, %v1394
    %v1410 = vpack.c.b16 %v1397, %v1396
    %v1411 = vpack.c.b16 %v1399, %v1398
    %v1412 = vpack.c.b16 %v1401, %v1400
    %v1413 = vpack.c.b16 %v1403, %v1402
    %v1414 = vpack.c.b16 %v1405, %v1404
    %v1415 = vpack.c.b16 %v1407, %v1406
    %1424 = vmatprep.subr.bf16.mxu0 0
    %1425 = vmatpush1.bf16.msra.mxu0 %v1415
    %1426 = vmatprep.subr.bf16.mxu0 0
    %1427 = vmatpush1.bf16.msra.mxu0 %v1414
    %1428 = vmatprep.subr.bf16.mxu0 0
    %1429 = vmatpush1.bf16.msra.mxu0 %v1413
    %1430 = vmatprep.subr.bf16.mxu0 0
    %1431 = vmatpush1.bf16.msra.mxu0 %v1412
    %1432 = vmatprep.subr.bf16.mxu0 0
    %1433 = vmatpush1.bf16.msra.mxu0 %v1411
    %1434 = vmatprep.subr.bf16.mxu0 0
    %1435 = vmatpush1.bf16.msra.mxu0 %v1410
    %1436 = vmatprep.subr.bf16.mxu0 0
    %1437 = vmatpush1.bf16.msra.mxu0 %v1409
    %1438 = vmatprep.subr.bf16.mxu0 0
    %1439 = vmatpush1.bf16.msra.mxu0 %v1408
    %1440 = vmatprep.subr.bf16.mxu0 0
    %1441 = vmatpush2.bf16.msra.mxu0 0
    %1442 = vmatprep.subr.bf16.mxu0 0
    %1443 = vmatpush2.bf16.msra.mxu0 0
    %1444 = vmatprep.subr.bf16.mxu0 0
    %1445 = vmatpush2.bf16.msra.mxu0 0
    %1446 = vmatprep.subr.bf16.mxu0 0
    %1447 = vmatpush2.bf16.msra.mxu0 0
    %1448 = vmatprep.subr.bf16.mxu0 0
    %1449 = vmatpush2.bf16.msra.mxu0 0
    %1450 = vmatprep.subr.bf16.mxu0 0
    %1451 = vmatpush2.bf16.msra.mxu0 0
    %1452 = vmatprep.subr.bf16.mxu0 0
    %1453 = vmatpush2.bf16.msra.mxu0 0
    %1454 = vmatprep.subr.bf16.mxu0 0
    %1455 = vmatpush2.bf16.msra.mxu0 0
    %1456 = vmatprep.mubr.bf16.mxu0 0
    %1457 = vmatmul.mubr.bf16.gmra.mxu0 %v1352
    %v1458 = vpop.f32.mrf.mxu0
    %v1459 = vadd.f32 %v1374, %v1458
    %v1460 = vpop.f32.mrf.mxu0
    %v1461 = vpop.f32.mrf.mxu0
    %v1462 = vadd.f32 %v1374, %v1461
    %v1463 = vpop.f32.mrf.mxu0
    %1464 = vdwg.mxu0
    %1465 = vmax.xlane.f32.xlu0 %v1459
    %v1466 = vpop.xlane.xlu0 %1465
    %1467 = vmax.xlane.f32.xlu0 %v1462
    %v1468 = vpop.xlane.xlu0 %1467
    %v1469 = vsub.f32 %v1459, %v1466
    %v1470 = vsub.f32 %v1462, %v1468
    %v1471 = vmul.f32 %v1469, 1.442695
    %v1472 = vpow.pop %v1471
    %v1473 = vmul.f32 %v1470, 1.442695
    %v1474 = vpow.pop %v1473
    %1475 = vadd.xlane.f32.xlu0 %v1472
    %v1476 = vpop.xlane.xlu0 %1475
    %1477 = vadd.xlane.f32.xlu0 %v1474
    %v1478 = vpop.xlane.xlu0 %1477
    %v1479 = vlog2.pop %v1476
    %v1480 = vmul.f32 %v1479, 0.6931472
    %v1481 = vlog2.pop %v1478
    %v1482 = vmul.f32 %v1481, 0.6931472
    %v1483 = vsub.f32 %v1469, %v1480
    %v1484 = vsub.f32 %v1470, %v1482
    %1485 = vst [vmem:[#allocation10] sm:$0xff] %v1483
    %1486 = vst [vmem:[#allocation10 + $0x8] sm:$0xff] %v1484
    // Predicated region
    $region74: #{_lambda_.1} parent=1 // pred_check
      _
    $region75: #{_lambda_.1} parent=1 // pred_check_branch
      %1488 = sbr.rel (0) target = $region77
    $region76: #{_lambda_.1} parent=1 // pred_region
      %s1490 = ssub.s32 256, 256
      %1491 = vsyncadd [#allocation4], %s1490
      %s1492 = sshll.u32 [#allocation10], 4
      %s1493 = int_to_ptr.vmem [resolvable:$true] %s1492
      %1498 = dma.vmem_to_hbm [thread:$0]  %s1493, 256, %s14, [#allocation4], 128, 128, 8
    $region77: #{_lambda_.1} parent=1 // pred_fallthru
      _
    // Predicated region
    $region78: #{_lambda_.1} parent=1 // pred_check
      _
    $region79: #{_lambda_.1} parent=1 // pred_check_branch
      %1500 = sbr.rel (0) target = $region81
    $region80: #{_lambda_.1} parent=1 // pred_region
      %1501 = dma.done [#allocation4], 256
    $region81: #{_lambda_.1} parent=1 // pred_fallthru
      _
    %1502 = vsyncpa [#allocation3], 1
    %1503 = vsyncpa [#allocation6], 1
    %1504 = vsyncpa [#allocation9], 1
    %1505 = vsyncpa [#allocation4], 1

</llo_original>
